<compile_context>
chip_gen: v7x
topology: tpu7x:2x2x1
jax: 0.10.0
libtpu: 0.0.40
codegen_flags: <defaults>
</compile_context>

<pallas_src>
import math

import jax
import jax.numpy as jnp
from jax.experimental import pallas as pl


# ----------------------------- fused model kernel -----------------------------
def _build_fused_lstm_kernel(num_layers, seq_len, hidden_dim, dpad, out_dim):
    """Builds the fused kernel body for a fixed (static) model configuration."""
    L, T, H = num_layers, seq_len, hidden_dim

    def kernel(x_ref, *refs):
        # refs = (w_0..w_{L-1}, b_0..b_{L-1}, fc_w, fc_b, out)
        w_refs = refs[:L]
        b_refs = refs[L:2 * L]
        fc_w_ref = refs[2 * L]
        fc_b_ref = refs[2 * L + 1]
        out_ref = refs[2 * L + 2]
        B = x_ref.shape[1]

        def step(t, carry):
            hs, cs = carry
            inp = x_ref[t]                                   # (B, Dpad): layer-0 input at t
            new_hs, new_cs = [], []
            for l in range(L):
                h_prev, c_prev = hs[l], cs[l]
                if l > 0 and dpad > H:
                    # Padded weight rows are zero, so pad values are don't-care.
                    inp = jnp.pad(inp, ((0, 0), (0, dpad - H)))
                xh = jnp.concatenate([inp, h_prev], axis=-1)  # (B, Dpad + H)
                # Single MXU matmul per layer-step (merged input + recurrent weights).
                gates = (
                    jnp.dot(xh, w_refs[l][...], preferred_element_type=jnp.float32)
                    + b_refs[l][...]
                )                                             # (B, 4H), gate order i,f,g,o
                # Whole-vreg transcendentals (EUP) + lane-mask blend (VPU) instead of
                # applying sigmoid/tanh to narrow H-lane slices.
                sig = jax.nn.sigmoid(gates)
                tnh = jnp.tanh(gates)
                lane = jax.lax.broadcasted_iota(jnp.int32, gates.shape, 1)
                act = jnp.where((lane >= 2 * H) & (lane < 3 * H), tnh, sig)
                i_g = act[:, 0 * H:1 * H]
                f_g = act[:, 1 * H:2 * H]
                g_g = act[:, 2 * H:3 * H]
                o_g = act[:, 3 * H:4 * H]
                c_new = f_g * c_prev + i_g * g_g
                h_new = o_g * jnp.tanh(c_new)
                new_hs.append(h_new)
                new_cs.append(c_new)
                inp = h_new          # dropout between layers == identity (eval semantics)
            return tuple(new_hs), tuple(new_cs)

        zero = jnp.zeros((B, H), jnp.float32)
        carry = (tuple(zero for _ in range(L)), tuple(zero for _ in range(L)))
        if T <= 32:
            # Small static T: fully unroll at trace time (static x_ref[t] indices, best
            # LLO scheduling).  Live state is tiny, so there is no spill pressure.
            for t in range(T):
                carry = step(t, carry)
        else:
            carry = jax.lax.fori_loop(0, T, step, carry)
        h_last = carry[0][L - 1]                              # (B, H) == out[:, -1, :]

        # Final Linear head, fused into the same kernel.
        if out_dim == 1:
            # O == 1: VPU multiply + lane reduce; avoids a degenerate N=1 MXU op.
            out = jnp.sum(h_last * fc_w_ref[...], axis=-1, keepdims=True) + fc_b_ref[...]
        else:
            out = (
                jax.lax.dot_general(h_last, fc_w_ref[...],
                                    (((1,), (1,)), ((), ())),
                                    preferred_element_type=jnp.float32)
                + fc_b_ref[...]
            )
        out_ref[...] = out.astype(out_ref.dtype)

    return kernel


# ------------------------------- model wrapper --------------------------------
def init_lstm_model_params(key, input_dim, hidden_dim, layer_dim, output_dim):
    """PyTorch-style U(-1/sqrt(H), 1/sqrt(H)) init; weights pre-packed for the fused kernel.

    Per layer: w = [[W_ih^T (zero-padded to Dpad rows)], [W_hh^T]]  -> (Dpad + H, 4H)
               b = (b_ih + b_hh)                                    -> (1, 4H)
    Gate/column order is PyTorch's (i, f, g, o).  fc_w keeps PyTorch's (O, H) layout.
    """
    H = hidden_dim
    dpad = max(input_dim, H)
    bound = 1.0 / math.sqrt(H)
    layers = []
    for l in range(layer_dim):
        in_d = input_dim if l == 0 else H
        key, k1, k2, k3, k4 = jax.random.split(key, 5)
        w_ih = jax.random.uniform(k1, (4 * H, in_d), jnp.float32, -bound, bound)
        w_hh = jax.random.uniform(k2, (4 * H, H), jnp.float32, -bound, bound)
        b_ih = jax.random.uniform(k3, (4 * H,), jnp.float32, -bound, bound)
        b_hh = jax.random.uniform(k4, (4 * H,), jnp.float32, -bound, bound)
        w_top = jnp.zeros((dpad, 4 * H), jnp.float32).at[:in_d, :].set(w_ih.T)
        layers.append({
            "w": jnp.concatenate([w_top, w_hh.T], axis=0),    # (Dpad + H, 4H)
            "b": (b_ih + b_hh).reshape(1, 4 * H),
        })
    key, k5, k6 = jax.random.split(key, 3)
    fc_w = jax.random.uniform(k5, (output_dim, H), jnp.float32, -bound, bound)
    fc_b = jax.random.uniform(k6, (output_dim,), jnp.float32, -bound, bound)
    return {"layers": layers, "fc_w": fc_w, "fc_b": fc_b.reshape(1, output_dim)}


@jax.jit
def lstm_model_forward(params, x):
    """x: (B, T, input_dim) batch_first (like the PyTorch module) -> (B, output_dim)."""
    layers = params["layers"]
    L = len(layers)
    H = layers[0]["w"].shape[1] // 4
    dpad = layers[0]["w"].shape[0] - H
    fc_w = params["fc_w"]                       # (O, H)   PyTorch layout
    fc_b = params["fc_b"]                       # (1, O)
    O = fc_w.shape[0]

    B, T, Din = x.shape
    # Time-major + feature pad to Dpad so every layer-step is one uniform
    # (B, Dpad+H) x (Dpad+H, 4H) matmul.  Tiny one-off reshuffle, fused into this jit.
    x_tm = jnp.transpose(x.astype(jnp.float32), (1, 0, 2))    # (T, B, Din)
    if Din < dpad:
        x_tm = jnp.pad(x_tm, ((0, 0), (0, 0), (0, dpad - Din)))

    kernel = _build_fused_lstm_kernel(L, T, H, dpad, O)
    ws = [layer["w"] for layer in layers]
    bs = [layer["b"] for layer in layers]
    # No grid / BlockSpecs: the whole problem fits comfortably in VMEM, so every operand
    # is a single full-array VMEM block and the recurrence runs entirely on-chip.
    return pl.pallas_call(
        kernel,
        out_shape=jax.ShapeDtypeStruct((B, O), jnp.float32),
    )(x_tm, *ws, *bs, fc_w, fc_b)


# ------------------------------ pure-JAX reference ------------------------------
def reference_forward(params, x):
    """XLA reference with identical math (for correctness checking)."""
    x = x.astype(jnp.float32)
    B, T, _ = x.shape
    seq = x
    for layer in params["layers"]:
        W, b = layer["w"], layer["b"]
        H = W.shape[1] // 4
        dpad = W.shape[0] - H
        h = jnp.zeros((B, H), jnp.float32)
        c = jnp.zeros((B, H), jnp.float32)
        outs = []
        for t in range(T):
            inp = seq[:, t, :]
            inp = jnp.pad(inp, ((0, 0), (0, dpad - inp.shape[1])))
            gates = jnp.concatenate([inp, h], axis=-1) @ W + b
            i = jax.nn.sigmoid(gates[:, :H])
            f = jax.nn.sigmoid(gates[:, H:2 * H])
            g = jnp.tanh(gates[:, 2 * H:3 * H])
            o = jax.nn.sigmoid(gates[:, 3 * H:])
            c = f * c + i * g
            h = o * jnp.tanh(c)
            outs.append(h)
        seq = jnp.stack(outs, axis=1)
    return seq[:, -1, :] @ params["fc_w"].T + params["fc_b"]


if __name__ == "__main__":
    # Shapes consistent with the module: batch=2, seq=8, input_dim=4, hidden_dim=32,
    # layer_dim=2, output_dim=1 (dropout_prob irrelevant in eval forward).
    input_dim, hidden_dim, layer_dim, output_dim = 4, 32, 2, 1
    batch, seq = 2, 8

    key = jax.random.PRNGKey(0)
    key, pkey, xkey = jax.random.split(key, 3)
    params = init_lstm_model_params(pkey, input_dim, hidden_dim, layer_dim, output_dim)
    x = jax.random.normal(xkey, (batch, seq, input_dim), jnp.float32)

    out = lstm_model_forward(params, x)
    jax.block_until_ready(out)
    assert out.shape == (batch, output_dim), out.shape

    ref = reference_forward(params, x)
    assert jnp.allclose(out, ref, atol=1e-4, rtol=1e-4), (out, ref)

    print("KERNEL_OK")
</pallas_src>

<mosaic_0001>
module attributes {stable_mosaic.version = 11 : i64} {
  func.func @kernel(%arg0: memref<8x2x32xf32, #tpu.memory_space<vmem>>, %arg1: memref<64x128xf32, #tpu.memory_space<vmem>>, %arg2: memref<64x128xf32, #tpu.memory_space<vmem>>, %arg3: memref<1x128xf32, #tpu.memory_space<vmem>>, %arg4: memref<1x128xf32, #tpu.memory_space<vmem>>, %arg5: memref<1x32xf32, #tpu.memory_space<vmem>>, %arg6: memref<1x1xf32, #tpu.memory_space<vmem>>, %arg7: memref<2x1xf32, #tpu.memory_space<vmem>>) attributes {dimension_semantics = [], scalar_prefetch = 0 : i64, scratch_operands = 0 : i64, tpu.core_type = #tpu.core_type<tc>} {
    %cst = arith.constant 0.000000e+00 : f32
    %0 = vector.broadcast %cst : f32 to vector<2x32xf32>
    %c0 = arith.constant 0 : index
    %c0_0 = arith.constant 0 : index
    %c0_1 = arith.constant 0 : index
    %1 = vector.load %arg0[%c0, %c0_0, %c0_1] : memref<8x2x32xf32, #tpu.memory_space<vmem>>, vector<1x2x32xf32>
    %2 = vector.shape_cast %1 : vector<1x2x32xf32> to vector<2x32xf32>
    %3 = tpu.concatenate %2, %0 in 1 : vector<2x32xf32>, vector<2x32xf32> -> vector<2x64xf32>
    %c0_2 = arith.constant 0 : index
    %c0_3 = arith.constant 0 : index
    %4 = vector.load %arg1[%c0_2, %c0_3] : memref<64x128xf32, #tpu.memory_space<vmem>>, vector<64x128xf32>
    %cst_4 = arith.constant dense<0.000000e+00> : vector<2x128xf32>
    %5 = tpu.matmul %3, %4, %cst_4 {dimension_numbers = #tpu.dot_dimension_numbers<[1], [0], [0], [1], [0, 0, 1, 1], [], []>} : vector<2x64xf32>, vector<64x128xf32>, vector<2x128xf32> -> vector<2x128xf32>
    %c0_5 = arith.constant 0 : index
    %c0_6 = arith.constant 0 : index
    %6 = vector.load %arg3[%c0_5, %c0_6] : memref<1x128xf32, #tpu.memory_space<vmem>>, vector<1x128xf32>
    %7 = vector.broadcast %6 : vector<1x128xf32> to vector<2x128xf32>
    %8 = arith.addf %5, %7 : vector<2x128xf32>
    %9 = arith.negf %8 : vector<2x128xf32>
    %10 = math.exp %9 : vector<2x128xf32>
    %cst_7 = arith.constant 1.000000e+00 : f32
    %11 = vector.broadcast %cst_7 : f32 to vector<2x128xf32>
    %12 = arith.addf %11, %10 : vector<2x128xf32>
    %13 = arith.divf %11, %12 : vector<2x128xf32>
    %14 = math.tanh %8 : vector<2x128xf32>
    %15 = tpu.iota {dimensions = array<i32: 1>} : vector<2x128xi32>
    %c64_i32 = arith.constant 64 : i32
    %16 = vector.broadcast %c64_i32 : i32 to vector<2x128xi32>
    %17 = arith.cmpi sge, %15, %16 : vector<2x128xi32>
    %c96_i32 = arith.constant 96 : i32
    %18 = vector.broadcast %c96_i32 : i32 to vector<2x128xi32>
    %19 = arith.cmpi slt, %15, %18 : vector<2x128xi32>
    %20 = arith.andi %17, %19 : vector<2x128xi1>
    %21 = arith.select %20, %14, %13 : vector<2x128xi1>, vector<2x128xf32>
    %22 = vector.extract_strided_slice %21 {offsets = [0, 0], sizes = [2, 32], strides = [1, 1]} : vector<2x128xf32> to vector<2x32xf32>
    %23 = vector.extract_strided_slice %21 {offsets = [0, 32], sizes = [2, 32], strides = [1, 1]} : vector<2x128xf32> to vector<2x32xf32>
    %24 = vector.extract_strided_slice %21 {offsets = [0, 64], sizes = [2, 32], strides = [1, 1]} : vector<2x128xf32> to vector<2x32xf32>
    %25 = vector.extract_strided_slice %21 {offsets = [0, 96], sizes = [2, 32], strides = [1, 1]} : vector<2x128xf32> to vector<2x32xf32>
    %26 = arith.mulf %23, %0 : vector<2x32xf32>
    %27 = arith.mulf %22, %24 : vector<2x32xf32>
    %28 = arith.addf %26, %27 : vector<2x32xf32>
    %29 = math.tanh %28 : vector<2x32xf32>
    %30 = arith.mulf %25, %29 : vector<2x32xf32>
    %31 = tpu.concatenate %30, %0 in 1 : vector<2x32xf32>, vector<2x32xf32> -> vector<2x64xf32>
    %c0_8 = arith.constant 0 : index
    %c0_9 = arith.constant 0 : index
    %32 = vector.load %arg2[%c0_8, %c0_9] : memref<64x128xf32, #tpu.memory_space<vmem>>, vector<64x128xf32>
    %cst_10 = arith.constant dense<0.000000e+00> : vector<2x128xf32>
    %33 = tpu.matmul %31, %32, %cst_10 {dimension_numbers = #tpu.dot_dimension_numbers<[1], [0], [0], [1], [0, 0, 1, 1], [], []>} : vector<2x64xf32>, vector<64x128xf32>, vector<2x128xf32> -> vector<2x128xf32>
    %c0_11 = arith.constant 0 : index
    %c0_12 = arith.constant 0 : index
    %34 = vector.load %arg4[%c0_11, %c0_12] : memref<1x128xf32, #tpu.memory_space<vmem>>, vector<1x128xf32>
    %35 = vector.broadcast %34 : vector<1x128xf32> to vector<2x128xf32>
    %36 = arith.addf %33, %35 : vector<2x128xf32>
    %37 = arith.negf %36 : vector<2x128xf32>
    %38 = math.exp %37 : vector<2x128xf32>
    %cst_13 = arith.constant 1.000000e+00 : f32
    %39 = vector.broadcast %cst_13 : f32 to vector<2x128xf32>
    %40 = arith.addf %39, %38 : vector<2x128xf32>
    %41 = arith.divf %39, %40 : vector<2x128xf32>
    %42 = math.tanh %36 : vector<2x128xf32>
    %43 = tpu.iota {dimensions = array<i32: 1>} : vector<2x128xi32>
    %c64_i32_14 = arith.constant 64 : i32
    %44 = vector.broadcast %c64_i32_14 : i32 to vector<2x128xi32>
    %45 = arith.cmpi sge, %43, %44 : vector<2x128xi32>
    %c96_i32_15 = arith.constant 96 : i32
    %46 = vector.broadcast %c96_i32_15 : i32 to vector<2x128xi32>
    %47 = arith.cmpi slt, %43, %46 : vector<2x128xi32>
    %48 = arith.andi %45, %47 : vector<2x128xi1>
    %49 = arith.select %48, %42, %41 : vector<2x128xi1>, vector<2x128xf32>
    %50 = vector.extract_strided_slice %49 {offsets = [0, 0], sizes = [2, 32], strides = [1, 1]} : vector<2x128xf32> to vector<2x32xf32>
    %51 = vector.extract_strided_slice %49 {offsets = [0, 32], sizes = [2, 32], strides = [1, 1]} : vector<2x128xf32> to vector<2x32xf32>
    %52 = vector.extract_strided_slice %49 {offsets = [0, 64], sizes = [2, 32], strides = [1, 1]} : vector<2x128xf32> to vector<2x32xf32>
    %53 = vector.extract_strided_slice %49 {offsets = [0, 96], sizes = [2, 32], strides = [1, 1]} : vector<2x128xf32> to vector<2x32xf32>
    %54 = arith.mulf %51, %0 : vector<2x32xf32>
    %55 = arith.mulf %50, %52 : vector<2x32xf32>
    %56 = arith.addf %54, %55 : vector<2x32xf32>
    %57 = math.tanh %56 : vector<2x32xf32>
    %58 = arith.mulf %53, %57 : vector<2x32xf32>
    %c1 = arith.constant 1 : index
    %c0_16 = arith.constant 0 : index
    %c0_17 = arith.constant 0 : index
    %59 = vector.load %arg0[%c1, %c0_16, %c0_17] : memref<8x2x32xf32, #tpu.memory_space<vmem>>, vector<1x2x32xf32>
    %60 = vector.shape_cast %59 : vector<1x2x32xf32> to vector<2x32xf32>
    %61 = tpu.concatenate %60, %30 in 1 : vector<2x32xf32>, vector<2x32xf32> -> vector<2x64xf32>
    %c0_18 = arith.constant 0 : index
    %c0_19 = arith.constant 0 : index
    %62 = vector.load %arg1[%c0_18, %c0_19] : memref<64x128xf32, #tpu.memory_space<vmem>>, vector<64x128xf32>
    %cst_20 = arith.constant dense<0.000000e+00> : vector<2x128xf32>
    %63 = tpu.matmul %61, %62, %cst_20 {dimension_numbers = #tpu.dot_dimension_numbers<[1], [0], [0], [1], [0, 0, 1, 1], [], []>} : vector<2x64xf32>, vector<64x128xf32>, vector<2x128xf32> -> vector<2x128xf32>
    %c0_21 = arith.constant 0 : index
    %c0_22 = arith.constant 0 : index
    %64 = vector.load %arg3[%c0_21, %c0_22] : memref<1x128xf32, #tpu.memory_space<vmem>>, vector<1x128xf32>
    %65 = vector.broadcast %64 : vector<1x128xf32> to vector<2x128xf32>
    %66 = arith.addf %63, %65 : vector<2x128xf32>
    %67 = arith.negf %66 : vector<2x128xf32>
    %68 = math.exp %67 : vector<2x128xf32>
    %cst_23 = arith.constant 1.000000e+00 : f32
    %69 = vector.broadcast %cst_23 : f32 to vector<2x128xf32>
    %70 = arith.addf %69, %68 : vector<2x128xf32>
    %71 = arith.divf %69, %70 : vector<2x128xf32>
    %72 = math.tanh %66 : vector<2x128xf32>
    %73 = tpu.iota {dimensions = array<i32: 1>} : vector<2x128xi32>
    %c64_i32_24 = arith.constant 64 : i32
    %74 = vector.broadcast %c64_i32_24 : i32 to vector<2x128xi32>
    %75 = arith.cmpi sge, %73, %74 : vector<2x128xi32>
    %c96_i32_25 = arith.constant 96 : i32
    %76 = vector.broadcast %c96_i32_25 : i32 to vector<2x128xi32>
    %77 = arith.cmpi slt, %73, %76 : vector<2x128xi32>
    %78 = arith.andi %75, %77 : vector<2x128xi1>
    %79 = arith.select %78, %72, %71 : vector<2x128xi1>, vector<2x128xf32>
    %80 = vector.extract_strided_slice %79 {offsets = [0, 0], sizes = [2, 32], strides = [1, 1]} : vector<2x128xf32> to vector<2x32xf32>
    %81 = vector.extract_strided_slice %79 {offsets = [0, 32], sizes = [2, 32], strides = [1, 1]} : vector<2x128xf32> to vector<2x32xf32>
    %82 = vector.extract_strided_slice %79 {offsets = [0, 64], sizes = [2, 32], strides = [1, 1]} : vector<2x128xf32> to vector<2x32xf32>
    %83 = vector.extract_strided_slice %79 {offsets = [0, 96], sizes = [2, 32], strides = [1, 1]} : vector<2x128xf32> to vector<2x32xf32>
    %84 = arith.mulf %81, %28 : vector<2x32xf32>
    %85 = arith.mulf %80, %82 : vector<2x32xf32>
    %86 = arith.addf %84, %85 : vector<2x32xf32>
    %87 = math.tanh %86 : vector<2x32xf32>
    %88 = arith.mulf %83, %87 : vector<2x32xf32>
    %89 = tpu.concatenate %88, %58 in 1 : vector<2x32xf32>, vector<2x32xf32> -> vector<2x64xf32>
    %c0_26 = arith.constant 0 : index
    %c0_27 = arith.constant 0 : index
    %90 = vector.load %arg2[%c0_26, %c0_27] : memref<64x128xf32, #tpu.memory_space<vmem>>, vector<64x128xf32>
    %cst_28 = arith.constant dense<0.000000e+00> : vector<2x128xf32>
    %91 = tpu.matmul %89, %90, %cst_28 {dimension_numbers = #tpu.dot_dimension_numbers<[1], [0], [0], [1], [0, 0, 1, 1], [], []>} : vector<2x64xf32>, vector<64x128xf32>, vector<2x128xf32> -> vector<2x128xf32>
    %c0_29 = arith.constant 0 : index
    %c0_30 = arith.constant 0 : index
    %92 = vector.load %arg4[%c0_29, %c0_30] : memref<1x128xf32, #tpu.memory_space<vmem>>, vector<1x128xf32>
    %93 = vector.broadcast %92 : vector<1x128xf32> to vector<2x128xf32>
    %94 = arith.addf %91, %93 : vector<2x128xf32>
    %95 = arith.negf %94 : vector<2x128xf32>
    %96 = math.exp %95 : vector<2x128xf32>
    %cst_31 = arith.constant 1.000000e+00 : f32
    %97 = vector.broadcast %cst_31 : f32 to vector<2x128xf32>
    %98 = arith.addf %97, %96 : vector<2x128xf32>
    %99 = arith.divf %97, %98 : vector<2x128xf32>
    %100 = math.tanh %94 : vector<2x128xf32>
    %101 = tpu.iota {dimensions = array<i32: 1>} : vector<2x128xi32>
    %c64_i32_32 = arith.constant 64 : i32
    %102 = vector.broadcast %c64_i32_32 : i32 to vector<2x128xi32>
    %103 = arith.cmpi sge, %101, %102 : vector<2x128xi32>
    %c96_i32_33 = arith.constant 96 : i32
    %104 = vector.broadcast %c96_i32_33 : i32 to vector<2x128xi32>
    %105 = arith.cmpi slt, %101, %104 : vector<2x128xi32>
    %106 = arith.andi %103, %105 : vector<2x128xi1>
    %107 = arith.select %106, %100, %99 : vector<2x128xi1>, vector<2x128xf32>
    %108 = vector.extract_strided_slice %107 {offsets = [0, 0], sizes = [2, 32], strides = [1, 1]} : vector<2x128xf32> to vector<2x32xf32>
    %109 = vector.extract_strided_slice %107 {offsets = [0, 32], sizes = [2, 32], strides = [1, 1]} : vector<2x128xf32> to vector<2x32xf32>
    %110 = vector.extract_strided_slice %107 {offsets = [0, 64], sizes = [2, 32], strides = [1, 1]} : vector<2x128xf32> to vector<2x32xf32>
    %111 = vector.extract_strided_slice %107 {offsets = [0, 96], sizes = [2, 32], strides = [1, 1]} : vector<2x128xf32> to vector<2x32xf32>
    %112 = arith.mulf %109, %56 : vector<2x32xf32>
    %113 = arith.mulf %108, %110 : vector<2x32xf32>
    %114 = arith.addf %112, %113 : vector<2x32xf32>
    %115 = math.tanh %114 : vector<2x32xf32>
    %116 = arith.mulf %111, %115 : vector<2x32xf32>
    %c2 = arith.constant 2 : index
    %c0_34 = arith.constant 0 : index
    %c0_35 = arith.constant 0 : index
    %117 = vector.load %arg0[%c2, %c0_34, %c0_35] : memref<8x2x32xf32, #tpu.memory_space<vmem>>, vector<1x2x32xf32>
    %118 = vector.shape_cast %117 : vector<1x2x32xf32> to vector<2x32xf32>
    %119 = tpu.concatenate %118, %88 in 1 : vector<2x32xf32>, vector<2x32xf32> -> vector<2x64xf32>
    %c0_36 = arith.constant 0 : index
    %c0_37 = arith.constant 0 : index
    %120 = vector.load %arg1[%c0_36, %c0_37] : memref<64x128xf32, #tpu.memory_space<vmem>>, vector<64x128xf32>
    %cst_38 = arith.constant dense<0.000000e+00> : vector<2x128xf32>
    %121 = tpu.matmul %119, %120, %cst_38 {dimension_numbers = #tpu.dot_dimension_numbers<[1], [0], [0], [1], [0, 0, 1, 1], [], []>} : vector<2x64xf32>, vector<64x128xf32>, vector<2x128xf32> -> vector<2x128xf32>
    %c0_39 = arith.constant 0 : index
    %c0_40 = arith.constant 0 : index
    %122 = vector.load %arg3[%c0_39, %c0_40] : memref<1x128xf32, #tpu.memory_space<vmem>>, vector<1x128xf32>
    %123 = vector.broadcast %122 : vector<1x128xf32> to vector<2x128xf32>
    %124 = arith.addf %121, %123 : vector<2x128xf32>
    %125 = arith.negf %124 : vector<2x128xf32>
    %126 = math.exp %125 : vector<2x128xf32>
    %cst_41 = arith.constant 1.000000e+00 : f32
    %127 = vector.broadcast %cst_41 : f32 to vector<2x128xf32>
    %128 = arith.addf %127, %126 : vector<2x128xf32>
    %129 = arith.divf %127, %128 : vector<2x128xf32>
    %130 = math.tanh %124 : vector<2x128xf32>
    %131 = tpu.iota {dimensions = array<i32: 1>} : vector<2x128xi32>
    %c64_i32_42 = arith.constant 64 : i32
    %132 = vector.broadcast %c64_i32_42 : i32 to vector<2x128xi32>
    %133 = arith.cmpi sge, %131, %132 : vector<2x128xi32>
    %c96_i32_43 = arith.constant 96 : i32
    %134 = vector.broadcast %c96_i32_43 : i32 to vector<2x128xi32>
    %135 = arith.cmpi slt, %131, %134 : vector<2x128xi32>
    %136 = arith.andi %133, %135 : vector<2x128xi1>
    %137 = arith.select %136, %130, %129 : vector<2x128xi1>, vector<2x128xf32>
    %138 = vector.extract_strided_slice %137 {offsets = [0, 0], sizes = [2, 32], strides = [1, 1]} : vector<2x128xf32> to vector<2x32xf32>
    %139 = vector.extract_strided_slice %137 {offsets = [0, 32], sizes = [2, 32], strides = [1, 1]} : vector<2x128xf32> to vector<2x32xf32>
    %140 = vector.extract_strided_slice %137 {offsets = [0, 64], sizes = [2, 32], strides = [1, 1]} : vector<2x128xf32> to vector<2x32xf32>
    %141 = vector.extract_strided_slice %137 {offsets = [0, 96], sizes = [2, 32], strides = [1, 1]} : vector<2x128xf32> to vector<2x32xf32>
    %142 = arith.mulf %139, %86 : vector<2x32xf32>
    %143 = arith.mulf %138, %140 : vector<2x32xf32>
    %144 = arith.addf %142, %143 : vector<2x32xf32>
    %145 = math.tanh %144 : vector<2x32xf32>
    %146 = arith.mulf %141, %145 : vector<2x32xf32>
    %147 = tpu.concatenate %146, %116 in 1 : vector<2x32xf32>, vector<2x32xf32> -> vector<2x64xf32>
    %c0_44 = arith.constant 0 : index
    %c0_45 = arith.constant 0 : index
    %148 = vector.load %arg2[%c0_44, %c0_45] : memref<64x128xf32, #tpu.memory_space<vmem>>, vector<64x128xf32>
    %cst_46 = arith.constant dense<0.000000e+00> : vector<2x128xf32>
    %149 = tpu.matmul %147, %148, %cst_46 {dimension_numbers = #tpu.dot_dimension_numbers<[1], [0], [0], [1], [0, 0, 1, 1], [], []>} : vector<2x64xf32>, vector<64x128xf32>, vector<2x128xf32> -> vector<2x128xf32>
    %c0_47 = arith.constant 0 : index
    %c0_48 = arith.constant 0 : index
    %150 = vector.load %arg4[%c0_47, %c0_48] : memref<1x128xf32, #tpu.memory_space<vmem>>, vector<1x128xf32>
    %151 = vector.broadcast %150 : vector<1x128xf32> to vector<2x128xf32>
    %152 = arith.addf %149, %151 : vector<2x128xf32>
    %153 = arith.negf %152 : vector<2x128xf32>
    %154 = math.exp %153 : vector<2x128xf32>
    %cst_49 = arith.constant 1.000000e+00 : f32
    %155 = vector.broadcast %cst_49 : f32 to vector<2x128xf32>
    %156 = arith.addf %155, %154 : vector<2x128xf32>
    %157 = arith.divf %155, %156 : vector<2x128xf32>
    %158 = math.tanh %152 : vector<2x128xf32>
    %159 = tpu.iota {dimensions = array<i32: 1>} : vector<2x128xi32>
    %c64_i32_50 = arith.constant 64 : i32
    %160 = vector.broadcast %c64_i32_50 : i32 to vector<2x128xi32>
    %161 = arith.cmpi sge, %159, %160 : vector<2x128xi32>
    %c96_i32_51 = arith.constant 96 : i32
    %162 = vector.broadcast %c96_i32_51 : i32 to vector<2x128xi32>
    %163 = arith.cmpi slt, %159, %162 : vector<2x128xi32>
    %164 = arith.andi %161, %163 : vector<2x128xi1>
    %165 = arith.select %164, %158, %157 : vector<2x128xi1>, vector<2x128xf32>
    %166 = vector.extract_strided_slice %165 {offsets = [0, 0], sizes = [2, 32], strides = [1, 1]} : vector<2x128xf32> to vector<2x32xf32>
    %167 = vector.extract_strided_slice %165 {offsets = [0, 32], sizes = [2, 32], strides = [1, 1]} : vector<2x128xf32> to vector<2x32xf32>
    %168 = vector.extract_strided_slice %165 {offsets = [0, 64], sizes = [2, 32], strides = [1, 1]} : vector<2x128xf32> to vector<2x32xf32>
    %169 = vector.extract_strided_slice %165 {offsets = [0, 96], sizes = [2, 32], strides = [1, 1]} : vector<2x128xf32> to vector<2x32xf32>
    %170 = arith.mulf %167, %114 : vector<2x32xf32>
    %171 = arith.mulf %166, %168 : vector<2x32xf32>
    %172 = arith.addf %170, %171 : vector<2x32xf32>
    %173 = math.tanh %172 : vector<2x32xf32>
    %174 = arith.mulf %169, %173 : vector<2x32xf32>
    %c3 = arith.constant 3 : index
    %c0_52 = arith.constant 0 : index
    %c0_53 = arith.constant 0 : index
    %175 = vector.load %arg0[%c3, %c0_52, %c0_53] : memref<8x2x32xf32, #tpu.memory_space<vmem>>, vector<1x2x32xf32>
    %176 = vector.shape_cast %175 : vector<1x2x32xf32> to vector<2x32xf32>
    %177 = tpu.concatenate %176, %146 in 1 : vector<2x32xf32>, vector<2x32xf32> -> vector<2x64xf32>
    %c0_54 = arith.constant 0 : index
    %c0_55 = arith.constant 0 : index
    %178 = vector.load %arg1[%c0_54, %c0_55] : memref<64x128xf32, #tpu.memory_space<vmem>>, vector<64x128xf32>
    %cst_56 = arith.constant dense<0.000000e+00> : vector<2x128xf32>
    %179 = tpu.matmul %177, %178, %cst_56 {dimension_numbers = #tpu.dot_dimension_numbers<[1], [0], [0], [1], [0, 0, 1, 1], [], []>} : vector<2x64xf32>, vector<64x128xf32>, vector<2x128xf32> -> vector<2x128xf32>
    %c0_57 = arith.constant 0 : index
    %c0_58 = arith.constant 0 : index
    %180 = vector.load %arg3[%c0_57, %c0_58] : memref<1x128xf32, #tpu.memory_space<vmem>>, vector<1x128xf32>
    %181 = vector.broadcast %180 : vector<1x128xf32> to vector<2x128xf32>
    %182 = arith.addf %179, %181 : vector<2x128xf32>
    %183 = arith.negf %182 : vector<2x128xf32>
    %184 = math.exp %183 : vector<2x128xf32>
    %cst_59 = arith.constant 1.000000e+00 : f32
    %185 = vector.broadcast %cst_59 : f32 to vector<2x128xf32>
    %186 = arith.addf %185, %184 : vector<2x128xf32>
    %187 = arith.divf %185, %186 : vector<2x128xf32>
    %188 = math.tanh %182 : vector<2x128xf32>
    %189 = tpu.iota {dimensions = array<i32: 1>} : vector<2x128xi32>
    %c64_i32_60 = arith.constant 64 : i32
    %190 = vector.broadcast %c64_i32_60 : i32 to vector<2x128xi32>
    %191 = arith.cmpi sge, %189, %190 : vector<2x128xi32>
    %c96_i32_61 = arith.constant 96 : i32
    %192 = vector.broadcast %c96_i32_61 : i32 to vector<2x128xi32>
    %193 = arith.cmpi slt, %189, %192 : vector<2x128xi32>
    %194 = arith.andi %191, %193 : vector<2x128xi1>
    %195 = arith.select %194, %188, %187 : vector<2x128xi1>, vector<2x128xf32>
    %196 = vector.extract_strided_slice %195 {offsets = [0, 0], sizes = [2, 32], strides = [1, 1]} : vector<2x128xf32> to vector<2x32xf32>
    %197 = vector.extract_strided_slice %195 {offsets = [0, 32], sizes = [2, 32], strides = [1, 1]} : vector<2x128xf32> to vector<2x32xf32>
    %198 = vector.extract_strided_slice %195 {offsets = [0, 64], sizes = [2, 32], strides = [1, 1]} : vector<2x128xf32> to vector<2x32xf32>
    %199 = vector.extract_strided_slice %195 {offsets = [0, 96], sizes = [2, 32], strides = [1, 1]} : vector<2x128xf32> to vector<2x32xf32>
    %200 = arith.mulf %197, %144 : vector<2x32xf32>
    %201 = arith.mulf %196, %198 : vector<2x32xf32>
    %202 = arith.addf %200, %201 : vector<2x32xf32>
    %203 = math.tanh %202 : vector<2x32xf32>
    %204 = arith.mulf %199, %203 : vector<2x32xf32>
    %205 = tpu.concatenate %204, %174 in 1 : vector<2x32xf32>, vector<2x32xf32> -> vector<2x64xf32>
    %c0_62 = arith.constant 0 : index
    %c0_63 = arith.constant 0 : index
    %206 = vector.load %arg2[%c0_62, %c0_63] : memref<64x128xf32, #tpu.memory_space<vmem>>, vector<64x128xf32>
    %cst_64 = arith.constant dense<0.000000e+00> : vector<2x128xf32>
    %207 = tpu.matmul %205, %206, %cst_64 {dimension_numbers = #tpu.dot_dimension_numbers<[1], [0], [0], [1], [0, 0, 1, 1], [], []>} : vector<2x64xf32>, vector<64x128xf32>, vector<2x128xf32> -> vector<2x128xf32>
    %c0_65 = arith.constant 0 : index
    %c0_66 = arith.constant 0 : index
    %208 = vector.load %arg4[%c0_65, %c0_66] : memref<1x128xf32, #tpu.memory_space<vmem>>, vector<1x128xf32>
    %209 = vector.broadcast %208 : vector<1x128xf32> to vector<2x128xf32>
    %210 = arith.addf %207, %209 : vector<2x128xf32>
    %211 = arith.negf %210 : vector<2x128xf32>
    %212 = math.exp %211 : vector<2x128xf32>
    %cst_67 = arith.constant 1.000000e+00 : f32
    %213 = vector.broadcast %cst_67 : f32 to vector<2x128xf32>
    %214 = arith.addf %213, %212 : vector<2x128xf32>
    %215 = arith.divf %213, %214 : vector<2x128xf32>
    %216 = math.tanh %210 : vector<2x128xf32>
    %217 = tpu.iota {dimensions = array<i32: 1>} : vector<2x128xi32>
    %c64_i32_68 = arith.constant 64 : i32
    %218 = vector.broadcast %c64_i32_68 : i32 to vector<2x128xi32>
    %219 = arith.cmpi sge, %217, %218 : vector<2x128xi32>
    %c96_i32_69 = arith.constant 96 : i32
    %220 = vector.broadcast %c96_i32_69 : i32 to vector<2x128xi32>
    %221 = arith.cmpi slt, %217, %220 : vector<2x128xi32>
    %222 = arith.andi %219, %221 : vector<2x128xi1>
    %223 = arith.select %222, %216, %215 : vector<2x128xi1>, vector<2x128xf32>
    %224 = vector.extract_strided_slice %223 {offsets = [0, 0], sizes = [2, 32], strides = [1, 1]} : vector<2x128xf32> to vector<2x32xf32>
    %225 = vector.extract_strided_slice %223 {offsets = [0, 32], sizes = [2, 32], strides = [1, 1]} : vector<2x128xf32> to vector<2x32xf32>
    %226 = vector.extract_strided_slice %223 {offsets = [0, 64], sizes = [2, 32], strides = [1, 1]} : vector<2x128xf32> to vector<2x32xf32>
    %227 = vector.extract_strided_slice %223 {offsets = [0, 96], sizes = [2, 32], strides = [1, 1]} : vector<2x128xf32> to vector<2x32xf32>
    %228 = arith.mulf %225, %172 : vector<2x32xf32>
    %229 = arith.mulf %224, %226 : vector<2x32xf32>
    %230 = arith.addf %228, %229 : vector<2x32xf32>
    %231 = math.tanh %230 : vector<2x32xf32>
    %232 = arith.mulf %227, %231 : vector<2x32xf32>
    %c4 = arith.constant 4 : index
    %c0_70 = arith.constant 0 : index
    %c0_71 = arith.constant 0 : index
    %233 = vector.load %arg0[%c4, %c0_70, %c0_71] : memref<8x2x32xf32, #tpu.memory_space<vmem>>, vector<1x2x32xf32>
    %234 = vector.shape_cast %233 : vector<1x2x32xf32> to vector<2x32xf32>
    %235 = tpu.concatenate %234, %204 in 1 : vector<2x32xf32>, vector<2x32xf32> -> vector<2x64xf32>
    %c0_72 = arith.constant 0 : index
    %c0_73 = arith.constant 0 : index
    %236 = vector.load %arg1[%c0_72, %c0_73] : memref<64x128xf32, #tpu.memory_space<vmem>>, vector<64x128xf32>
    %cst_74 = arith.constant dense<0.000000e+00> : vector<2x128xf32>
    %237 = tpu.matmul %235, %236, %cst_74 {dimension_numbers = #tpu.dot_dimension_numbers<[1], [0], [0], [1], [0, 0, 1, 1], [], []>} : vector<2x64xf32>, vector<64x128xf32>, vector<2x128xf32> -> vector<2x128xf32>
    %c0_75 = arith.constant 0 : index
    %c0_76 = arith.constant 0 : index
    %238 = vector.load %arg3[%c0_75, %c0_76] : memref<1x128xf32, #tpu.memory_space<vmem>>, vector<1x128xf32>
    %239 = vector.broadcast %238 : vector<1x128xf32> to vector<2x128xf32>
    %240 = arith.addf %237, %239 : vector<2x128xf32>
    %241 = arith.negf %240 : vector<2x128xf32>
    %242 = math.exp %241 : vector<2x128xf32>
    %cst_77 = arith.constant 1.000000e+00 : f32
    %243 = vector.broadcast %cst_77 : f32 to vector<2x128xf32>
    %244 = arith.addf %243, %242 : vector<2x128xf32>
    %245 = arith.divf %243, %244 : vector<2x128xf32>
    %246 = math.tanh %240 : vector<2x128xf32>
    %247 = tpu.iota {dimensions = array<i32: 1>} : vector<2x128xi32>
    %c64_i32_78 = arith.constant 64 : i32
    %248 = vector.broadcast %c64_i32_78 : i32 to vector<2x128xi32>
    %249 = arith.cmpi sge, %247, %248 : vector<2x128xi32>
    %c96_i32_79 = arith.constant 96 : i32
    %250 = vector.broadcast %c96_i32_79 : i32 to vector<2x128xi32>
    %251 = arith.cmpi slt, %247, %250 : vector<2x128xi32>
    %252 = arith.andi %249, %251 : vector<2x128xi1>
    %253 = arith.select %252, %246, %245 : vector<2x128xi1>, vector<2x128xf32>
    %254 = vector.extract_strided_slice %253 {offsets = [0, 0], sizes = [2, 32], strides = [1, 1]} : vector<2x128xf32> to vector<2x32xf32>
    %255 = vector.extract_strided_slice %253 {offsets = [0, 32], sizes = [2, 32], strides = [1, 1]} : vector<2x128xf32> to vector<2x32xf32>
    %256 = vector.extract_strided_slice %253 {offsets = [0, 64], sizes = [2, 32], strides = [1, 1]} : vector<2x128xf32> to vector<2x32xf32>
    %257 = vector.extract_strided_slice %253 {offsets = [0, 96], sizes = [2, 32], strides = [1, 1]} : vector<2x128xf32> to vector<2x32xf32>
    %258 = arith.mulf %255, %202 : vector<2x32xf32>
    %259 = arith.mulf %254, %256 : vector<2x32xf32>
    %260 = arith.addf %258, %259 : vector<2x32xf32>
    %261 = math.tanh %260 : vector<2x32xf32>
    %262 = arith.mulf %257, %261 : vector<2x32xf32>
    %263 = tpu.concatenate %262, %232 in 1 : vector<2x32xf32>, vector<2x32xf32> -> vector<2x64xf32>
    %c0_80 = arith.constant 0 : index
    %c0_81 = arith.constant 0 : index
    %264 = vector.load %arg2[%c0_80, %c0_81] : memref<64x128xf32, #tpu.memory_space<vmem>>, vector<64x128xf32>
    %cst_82 = arith.constant dense<0.000000e+00> : vector<2x128xf32>
    %265 = tpu.matmul %263, %264, %cst_82 {dimension_numbers = #tpu.dot_dimension_numbers<[1], [0], [0], [1], [0, 0, 1, 1], [], []>} : vector<2x64xf32>, vector<64x128xf32>, vector<2x128xf32> -> vector<2x128xf32>
    %c0_83 = arith.constant 0 : index
    %c0_84 = arith.constant 0 : index
    %266 = vector.load %arg4[%c0_83, %c0_84] : memref<1x128xf32, #tpu.memory_space<vmem>>, vector<1x128xf32>
    %267 = vector.broadcast %266 : vector<1x128xf32> to vector<2x128xf32>
    %268 = arith.addf %265, %267 : vector<2x128xf32>
    %269 = arith.negf %268 : vector<2x128xf32>
    %270 = math.exp %269 : vector<2x128xf32>
    %cst_85 = arith.constant 1.000000e+00 : f32
    %271 = vector.broadcast %cst_85 : f32 to vector<2x128xf32>
    %272 = arith.addf %271, %270 : vector<2x128xf32>
    %273 = arith.divf %271, %272 : vector<2x128xf32>
    %274 = math.tanh %268 : vector<2x128xf32>
    %275 = tpu.iota {dimensions = array<i32: 1>} : vector<2x128xi32>
    %c64_i32_86 = arith.constant 64 : i32
    %276 = vector.broadcast %c64_i32_86 : i32 to vector<2x128xi32>
    %277 = arith.cmpi sge, %275, %276 : vector<2x128xi32>
    %c96_i32_87 = arith.constant 96 : i32
    %278 = vector.broadcast %c96_i32_87 : i32 to vector<2x128xi32>
    %279 = arith.cmpi slt, %275, %278 : vector<2x128xi32>
    %280 = arith.andi %277, %279 : vector<2x128xi1>
    %281 = arith.select %280, %274, %273 : vector<2x128xi1>, vector<2x128xf32>
    %282 = vector.extract_strided_slice %281 {offsets = [0, 0], sizes = [2, 32], strides = [1, 1]} : vector<2x128xf32> to vector<2x32xf32>
    %283 = vector.extract_strided_slice %281 {offsets = [0, 32], sizes = [2, 32], strides = [1, 1]} : vector<2x128xf32> to vector<2x32xf32>
    %284 = vector.extract_strided_slice %281 {offsets = [0, 64], sizes = [2, 32], strides = [1, 1]} : vector<2x128xf32> to vector<2x32xf32>
    %285 = vector.extract_strided_slice %281 {offsets = [0, 96], sizes = [2, 32], strides = [1, 1]} : vector<2x128xf32> to vector<2x32xf32>
    %286 = arith.mulf %283, %230 : vector<2x32xf32>
    %287 = arith.mulf %282, %284 : vector<2x32xf32>
    %288 = arith.addf %286, %287 : vector<2x32xf32>
    %289 = math.tanh %288 : vector<2x32xf32>
    %290 = arith.mulf %285, %289 : vector<2x32xf32>
    %c5 = arith.constant 5 : index
    %c0_88 = arith.constant 0 : index
    %c0_89 = arith.constant 0 : index
    %291 = vector.load %arg0[%c5, %c0_88, %c0_89] : memref<8x2x32xf32, #tpu.memory_space<vmem>>, vector<1x2x32xf32>
    %292 = vector.shape_cast %291 : vector<1x2x32xf32> to vector<2x32xf32>
    %293 = tpu.concatenate %292, %262 in 1 : vector<2x32xf32>, vector<2x32xf32> -> vector<2x64xf32>
    %c0_90 = arith.constant 0 : index
    %c0_91 = arith.constant 0 : index
    %294 = vector.load %arg1[%c0_90, %c0_91] : memref<64x128xf32, #tpu.memory_space<vmem>>, vector<64x128xf32>
    %cst_92 = arith.constant dense<0.000000e+00> : vector<2x128xf32>
    %295 = tpu.matmul %293, %294, %cst_92 {dimension_numbers = #tpu.dot_dimension_numbers<[1], [0], [0], [1], [0, 0, 1, 1], [], []>} : vector<2x64xf32>, vector<64x128xf32>, vector<2x128xf32> -> vector<2x128xf32>
    %c0_93 = arith.constant 0 : index
    %c0_94 = arith.constant 0 : index
    %296 = vector.load %arg3[%c0_93, %c0_94] : memref<1x128xf32, #tpu.memory_space<vmem>>, vector<1x128xf32>
    %297 = vector.broadcast %296 : vector<1x128xf32> to vector<2x128xf32>
    %298 = arith.addf %295, %297 : vector<2x128xf32>
    %299 = arith.negf %298 : vector<2x128xf32>
    %300 = math.exp %299 : vector<2x128xf32>
    %cst_95 = arith.constant 1.000000e+00 : f32
    %301 = vector.broadcast %cst_95 : f32 to vector<2x128xf32>
    %302 = arith.addf %301, %300 : vector<2x128xf32>
    %303 = arith.divf %301, %302 : vector<2x128xf32>
    %304 = math.tanh %298 : vector<2x128xf32>
    %305 = tpu.iota {dimensions = array<i32: 1>} : vector<2x128xi32>
    %c64_i32_96 = arith.constant 64 : i32
    %306 = vector.broadcast %c64_i32_96 : i32 to vector<2x128xi32>
    %307 = arith.cmpi sge, %305, %306 : vector<2x128xi32>
    %c96_i32_97 = arith.constant 96 : i32
    %308 = vector.broadcast %c96_i32_97 : i32 to vector<2x128xi32>
    %309 = arith.cmpi slt, %305, %308 : vector<2x128xi32>
    %310 = arith.andi %307, %309 : vector<2x128xi1>
    %311 = arith.select %310, %304, %303 : vector<2x128xi1>, vector<2x128xf32>
    %312 = vector.extract_strided_slice %311 {offsets = [0, 0], sizes = [2, 32], strides = [1, 1]} : vector<2x128xf32> to vector<2x32xf32>
    %313 = vector.extract_strided_slice %311 {offsets = [0, 32], sizes = [2, 32], strides = [1, 1]} : vector<2x128xf32> to vector<2x32xf32>
    %314 = vector.extract_strided_slice %311 {offsets = [0, 64], sizes = [2, 32], strides = [1, 1]} : vector<2x128xf32> to vector<2x32xf32>
    %315 = vector.extract_strided_slice %311 {offsets = [0, 96], sizes = [2, 32], strides = [1, 1]} : vector<2x128xf32> to vector<2x32xf32>
    %316 = arith.mulf %313, %260 : vector<2x32xf32>
    %317 = arith.mulf %312, %314 : vector<2x32xf32>
    %318 = arith.addf %316, %317 : vector<2x32xf32>
    %319 = math.tanh %318 : vector<2x32xf32>
    %320 = arith.mulf %315, %319 : vector<2x32xf32>
    %321 = tpu.concatenate %320, %290 in 1 : vector<2x32xf32>, vector<2x32xf32> -> vector<2x64xf32>
    %c0_98 = arith.constant 0 : index
    %c0_99 = arith.constant 0 : index
    %322 = vector.load %arg2[%c0_98, %c0_99] : memref<64x128xf32, #tpu.memory_space<vmem>>, vector<64x128xf32>
    %cst_100 = arith.constant dense<0.000000e+00> : vector<2x128xf32>
    %323 = tpu.matmul %321, %322, %cst_100 {dimension_numbers = #tpu.dot_dimension_numbers<[1], [0], [0], [1], [0, 0, 1, 1], [], []>} : vector<2x64xf32>, vector<64x128xf32>, vector<2x128xf32> -> vector<2x128xf32>
    %c0_101 = arith.constant 0 : index
    %c0_102 = arith.constant 0 : index
    %324 = vector.load %arg4[%c0_101, %c0_102] : memref<1x128xf32, #tpu.memory_space<vmem>>, vector<1x128xf32>
    %325 = vector.broadcast %324 : vector<1x128xf32> to vector<2x128xf32>
    %326 = arith.addf %323, %325 : vector<2x128xf32>
    %327 = arith.negf %326 : vector<2x128xf32>
    %328 = math.exp %327 : vector<2x128xf32>
    %cst_103 = arith.constant 1.000000e+00 : f32
    %329 = vector.broadcast %cst_103 : f32 to vector<2x128xf32>
    %330 = arith.addf %329, %328 : vector<2x128xf32>
    %331 = arith.divf %329, %330 : vector<2x128xf32>
    %332 = math.tanh %326 : vector<2x128xf32>
    %333 = tpu.iota {dimensions = array<i32: 1>} : vector<2x128xi32>
    %c64_i32_104 = arith.constant 64 : i32
    %334 = vector.broadcast %c64_i32_104 : i32 to vector<2x128xi32>
    %335 = arith.cmpi sge, %333, %334 : vector<2x128xi32>
    %c96_i32_105 = arith.constant 96 : i32
    %336 = vector.broadcast %c96_i32_105 : i32 to vector<2x128xi32>
    %337 = arith.cmpi slt, %333, %336 : vector<2x128xi32>
    %338 = arith.andi %335, %337 : vector<2x128xi1>
    %339 = arith.select %338, %332, %331 : vector<2x128xi1>, vector<2x128xf32>
    %340 = vector.extract_strided_slice %339 {offsets = [0, 0], sizes = [2, 32], strides = [1, 1]} : vector<2x128xf32> to vector<2x32xf32>
    %341 = vector.extract_strided_slice %339 {offsets = [0, 32], sizes = [2, 32], strides = [1, 1]} : vector<2x128xf32> to vector<2x32xf32>
    %342 = vector.extract_strided_slice %339 {offsets = [0, 64], sizes = [2, 32], strides = [1, 1]} : vector<2x128xf32> to vector<2x32xf32>
    %343 = vector.extract_strided_slice %339 {offsets = [0, 96], sizes = [2, 32], strides = [1, 1]} : vector<2x128xf32> to vector<2x32xf32>
    %344 = arith.mulf %341, %288 : vector<2x32xf32>
    %345 = arith.mulf %340, %342 : vector<2x32xf32>
    %346 = arith.addf %344, %345 : vector<2x32xf32>
    %347 = math.tanh %346 : vector<2x32xf32>
    %348 = arith.mulf %343, %347 : vector<2x32xf32>
    %c6 = arith.constant 6 : index
    %c0_106 = arith.constant 0 : index
    %c0_107 = arith.constant 0 : index
    %349 = vector.load %arg0[%c6, %c0_106, %c0_107] : memref<8x2x32xf32, #tpu.memory_space<vmem>>, vector<1x2x32xf32>
    %350 = vector.shape_cast %349 : vector<1x2x32xf32> to vector<2x32xf32>
    %351 = tpu.concatenate %350, %320 in 1 : vector<2x32xf32>, vector<2x32xf32> -> vector<2x64xf32>
    %c0_108 = arith.constant 0 : index
    %c0_109 = arith.constant 0 : index
    %352 = vector.load %arg1[%c0_108, %c0_109] : memref<64x128xf32, #tpu.memory_space<vmem>>, vector<64x128xf32>
    %cst_110 = arith.constant dense<0.000000e+00> : vector<2x128xf32>
    %353 = tpu.matmul %351, %352, %cst_110 {dimension_numbers = #tpu.dot_dimension_numbers<[1], [0], [0], [1], [0, 0, 1, 1], [], []>} : vector<2x64xf32>, vector<64x128xf32>, vector<2x128xf32> -> vector<2x128xf32>
    %c0_111 = arith.constant 0 : index
    %c0_112 = arith.constant 0 : index
    %354 = vector.load %arg3[%c0_111, %c0_112] : memref<1x128xf32, #tpu.memory_space<vmem>>, vector<1x128xf32>
    %355 = vector.broadcast %354 : vector<1x128xf32> to vector<2x128xf32>
    %356 = arith.addf %353, %355 : vector<2x128xf32>
    %357 = arith.negf %356 : vector<2x128xf32>
    %358 = math.exp %357 : vector<2x128xf32>
    %cst_113 = arith.constant 1.000000e+00 : f32
    %359 = vector.broadcast %cst_113 : f32 to vector<2x128xf32>
    %360 = arith.addf %359, %358 : vector<2x128xf32>
    %361 = arith.divf %359, %360 : vector<2x128xf32>
    %362 = math.tanh %356 : vector<2x128xf32>
    %363 = tpu.iota {dimensions = array<i32: 1>} : vector<2x128xi32>
    %c64_i32_114 = arith.constant 64 : i32
    %364 = vector.broadcast %c64_i32_114 : i32 to vector<2x128xi32>
    %365 = arith.cmpi sge, %363, %364 : vector<2x128xi32>
    %c96_i32_115 = arith.constant 96 : i32
    %366 = vector.broadcast %c96_i32_115 : i32 to vector<2x128xi32>
    %367 = arith.cmpi slt, %363, %366 : vector<2x128xi32>
    %368 = arith.andi %365, %367 : vector<2x128xi1>
    %369 = arith.select %368, %362, %361 : vector<2x128xi1>, vector<2x128xf32>
    %370 = vector.extract_strided_slice %369 {offsets = [0, 0], sizes = [2, 32], strides = [1, 1]} : vector<2x128xf32> to vector<2x32xf32>
    %371 = vector.extract_strided_slice %369 {offsets = [0, 32], sizes = [2, 32], strides = [1, 1]} : vector<2x128xf32> to vector<2x32xf32>
    %372 = vector.extract_strided_slice %369 {offsets = [0, 64], sizes = [2, 32], strides = [1, 1]} : vector<2x128xf32> to vector<2x32xf32>
    %373 = vector.extract_strided_slice %369 {offsets = [0, 96], sizes = [2, 32], strides = [1, 1]} : vector<2x128xf32> to vector<2x32xf32>
    %374 = arith.mulf %371, %318 : vector<2x32xf32>
    %375 = arith.mulf %370, %372 : vector<2x32xf32>
    %376 = arith.addf %374, %375 : vector<2x32xf32>
    %377 = math.tanh %376 : vector<2x32xf32>
    %378 = arith.mulf %373, %377 : vector<2x32xf32>
    %379 = tpu.concatenate %378, %348 in 1 : vector<2x32xf32>, vector<2x32xf32> -> vector<2x64xf32>
    %c0_116 = arith.constant 0 : index
    %c0_117 = arith.constant 0 : index
    %380 = vector.load %arg2[%c0_116, %c0_117] : memref<64x128xf32, #tpu.memory_space<vmem>>, vector<64x128xf32>
    %cst_118 = arith.constant dense<0.000000e+00> : vector<2x128xf32>
    %381 = tpu.matmul %379, %380, %cst_118 {dimension_numbers = #tpu.dot_dimension_numbers<[1], [0], [0], [1], [0, 0, 1, 1], [], []>} : vector<2x64xf32>, vector<64x128xf32>, vector<2x128xf32> -> vector<2x128xf32>
    %c0_119 = arith.constant 0 : index
    %c0_120 = arith.constant 0 : index
    %382 = vector.load %arg4[%c0_119, %c0_120] : memref<1x128xf32, #tpu.memory_space<vmem>>, vector<1x128xf32>
    %383 = vector.broadcast %382 : vector<1x128xf32> to vector<2x128xf32>
    %384 = arith.addf %381, %383 : vector<2x128xf32>
    %385 = arith.negf %384 : vector<2x128xf32>
    %386 = math.exp %385 : vector<2x128xf32>
    %cst_121 = arith.constant 1.000000e+00 : f32
    %387 = vector.broadcast %cst_121 : f32 to vector<2x128xf32>
    %388 = arith.addf %387, %386 : vector<2x128xf32>
    %389 = arith.divf %387, %388 : vector<2x128xf32>
    %390 = math.tanh %384 : vector<2x128xf32>
    %391 = tpu.iota {dimensions = array<i32: 1>} : vector<2x128xi32>
    %c64_i32_122 = arith.constant 64 : i32
    %392 = vector.broadcast %c64_i32_122 : i32 to vector<2x128xi32>
    %393 = arith.cmpi sge, %391, %392 : vector<2x128xi32>
    %c96_i32_123 = arith.constant 96 : i32
    %394 = vector.broadcast %c96_i32_123 : i32 to vector<2x128xi32>
    %395 = arith.cmpi slt, %391, %394 : vector<2x128xi32>
    %396 = arith.andi %393, %395 : vector<2x128xi1>
    %397 = arith.select %396, %390, %389 : vector<2x128xi1>, vector<2x128xf32>
    %398 = vector.extract_strided_slice %397 {offsets = [0, 0], sizes = [2, 32], strides = [1, 1]} : vector<2x128xf32> to vector<2x32xf32>
    %399 = vector.extract_strided_slice %397 {offsets = [0, 32], sizes = [2, 32], strides = [1, 1]} : vector<2x128xf32> to vector<2x32xf32>
    %400 = vector.extract_strided_slice %397 {offsets = [0, 64], sizes = [2, 32], strides = [1, 1]} : vector<2x128xf32> to vector<2x32xf32>
    %401 = vector.extract_strided_slice %397 {offsets = [0, 96], sizes = [2, 32], strides = [1, 1]} : vector<2x128xf32> to vector<2x32xf32>
    %402 = arith.mulf %399, %346 : vector<2x32xf32>
    %403 = arith.mulf %398, %400 : vector<2x32xf32>
    %404 = arith.addf %402, %403 : vector<2x32xf32>
    %405 = math.tanh %404 : vector<2x32xf32>
    %406 = arith.mulf %401, %405 : vector<2x32xf32>
    %c7 = arith.constant 7 : index
    %c0_124 = arith.constant 0 : index
    %c0_125 = arith.constant 0 : index
    %407 = vector.load %arg0[%c7, %c0_124, %c0_125] : memref<8x2x32xf32, #tpu.memory_space<vmem>>, vector<1x2x32xf32>
    %408 = vector.shape_cast %407 : vector<1x2x32xf32> to vector<2x32xf32>
    %409 = tpu.concatenate %408, %378 in 1 : vector<2x32xf32>, vector<2x32xf32> -> vector<2x64xf32>
    %c0_126 = arith.constant 0 : index
    %c0_127 = arith.constant 0 : index
    %410 = vector.load %arg1[%c0_126, %c0_127] : memref<64x128xf32, #tpu.memory_space<vmem>>, vector<64x128xf32>
    %cst_128 = arith.constant dense<0.000000e+00> : vector<2x128xf32>
    %411 = tpu.matmul %409, %410, %cst_128 {dimension_numbers = #tpu.dot_dimension_numbers<[1], [0], [0], [1], [0, 0, 1, 1], [], []>} : vector<2x64xf32>, vector<64x128xf32>, vector<2x128xf32> -> vector<2x128xf32>
    %c0_129 = arith.constant 0 : index
    %c0_130 = arith.constant 0 : index
    %412 = vector.load %arg3[%c0_129, %c0_130] : memref<1x128xf32, #tpu.memory_space<vmem>>, vector<1x128xf32>
    %413 = vector.broadcast %412 : vector<1x128xf32> to vector<2x128xf32>
    %414 = arith.addf %411, %413 : vector<2x128xf32>
    %415 = arith.negf %414 : vector<2x128xf32>
    %416 = math.exp %415 : vector<2x128xf32>
    %cst_131 = arith.constant 1.000000e+00 : f32
    %417 = vector.broadcast %cst_131 : f32 to vector<2x128xf32>
    %418 = arith.addf %417, %416 : vector<2x128xf32>
    %419 = arith.divf %417, %418 : vector<2x128xf32>
    %420 = math.tanh %414 : vector<2x128xf32>
    %421 = tpu.iota {dimensions = array<i32: 1>} : vector<2x128xi32>
    %c64_i32_132 = arith.constant 64 : i32
    %422 = vector.broadcast %c64_i32_132 : i32 to vector<2x128xi32>
    %423 = arith.cmpi sge, %421, %422 : vector<2x128xi32>
    %c96_i32_133 = arith.constant 96 : i32
    %424 = vector.broadcast %c96_i32_133 : i32 to vector<2x128xi32>
    %425 = arith.cmpi slt, %421, %424 : vector<2x128xi32>
    %426 = arith.andi %423, %425 : vector<2x128xi1>
    %427 = arith.select %426, %420, %419 : vector<2x128xi1>, vector<2x128xf32>
    %428 = vector.extract_strided_slice %427 {offsets = [0, 0], sizes = [2, 32], strides = [1, 1]} : vector<2x128xf32> to vector<2x32xf32>
    %429 = vector.extract_strided_slice %427 {offsets = [0, 32], sizes = [2, 32], strides = [1, 1]} : vector<2x128xf32> to vector<2x32xf32>
    %430 = vector.extract_strided_slice %427 {offsets = [0, 64], sizes = [2, 32], strides = [1, 1]} : vector<2x128xf32> to vector<2x32xf32>
    %431 = vector.extract_strided_slice %427 {offsets = [0, 96], sizes = [2, 32], strides = [1, 1]} : vector<2x128xf32> to vector<2x32xf32>
    %432 = arith.mulf %429, %376 : vector<2x32xf32>
    %433 = arith.mulf %428, %430 : vector<2x32xf32>
    %434 = arith.addf %432, %433 : vector<2x32xf32>
    %435 = math.tanh %434 : vector<2x32xf32>
    %436 = arith.mulf %431, %435 : vector<2x32xf32>
    %437 = tpu.concatenate %436, %406 in 1 : vector<2x32xf32>, vector<2x32xf32> -> vector<2x64xf32>
    %c0_134 = arith.constant 0 : index
    %c0_135 = arith.constant 0 : index
    %438 = vector.load %arg2[%c0_134, %c0_135] : memref<64x128xf32, #tpu.memory_space<vmem>>, vector<64x128xf32>
    %cst_136 = arith.constant dense<0.000000e+00> : vector<2x128xf32>
    %439 = tpu.matmul %437, %438, %cst_136 {dimension_numbers = #tpu.dot_dimension_numbers<[1], [0], [0], [1], [0, 0, 1, 1], [], []>} : vector<2x64xf32>, vector<64x128xf32>, vector<2x128xf32> -> vector<2x128xf32>
    %c0_137 = arith.constant 0 : index
    %c0_138 = arith.constant 0 : index
    %440 = vector.load %arg4[%c0_137, %c0_138] : memref<1x128xf32, #tpu.memory_space<vmem>>, vector<1x128xf32>
    %441 = vector.broadcast %440 : vector<1x128xf32> to vector<2x128xf32>
    %442 = arith.addf %439, %441 : vector<2x128xf32>
    %443 = arith.negf %442 : vector<2x128xf32>
    %444 = math.exp %443 : vector<2x128xf32>
    %cst_139 = arith.constant 1.000000e+00 : f32
    %445 = vector.broadcast %cst_139 : f32 to vector<2x128xf32>
    %446 = arith.addf %445, %444 : vector<2x128xf32>
    %447 = arith.divf %445, %446 : vector<2x128xf32>
    %448 = math.tanh %442 : vector<2x128xf32>
    %449 = tpu.iota {dimensions = array<i32: 1>} : vector<2x128xi32>
    %c64_i32_140 = arith.constant 64 : i32
    %450 = vector.broadcast %c64_i32_140 : i32 to vector<2x128xi32>
    %451 = arith.cmpi sge, %449, %450 : vector<2x128xi32>
    %c96_i32_141 = arith.constant 96 : i32
    %452 = vector.broadcast %c96_i32_141 : i32 to vector<2x128xi32>
    %453 = arith.cmpi slt, %449, %452 : vector<2x128xi32>
    %454 = arith.andi %451, %453 : vector<2x128xi1>
    %455 = arith.select %454, %448, %447 : vector<2x128xi1>, vector<2x128xf32>
    %456 = vector.extract_strided_slice %455 {offsets = [0, 0], sizes = [2, 32], strides = [1, 1]} : vector<2x128xf32> to vector<2x32xf32>
    %457 = vector.extract_strided_slice %455 {offsets = [0, 32], sizes = [2, 32], strides = [1, 1]} : vector<2x128xf32> to vector<2x32xf32>
    %458 = vector.extract_strided_slice %455 {offsets = [0, 64], sizes = [2, 32], strides = [1, 1]} : vector<2x128xf32> to vector<2x32xf32>
    %459 = vector.extract_strided_slice %455 {offsets = [0, 96], sizes = [2, 32], strides = [1, 1]} : vector<2x128xf32> to vector<2x32xf32>
    %460 = arith.mulf %457, %404 : vector<2x32xf32>
    %461 = arith.mulf %456, %458 : vector<2x32xf32>
    %462 = arith.addf %460, %461 : vector<2x32xf32>
    %463 = math.tanh %462 : vector<2x32xf32>
    %464 = arith.mulf %459, %463 : vector<2x32xf32>
    %c0_142 = arith.constant 0 : index
    %c0_143 = arith.constant 0 : index
    %465 = vector.load %arg5[%c0_142, %c0_143] : memref<1x32xf32, #tpu.memory_space<vmem>>, vector<1x32xf32>
    %466 = vector.broadcast %465 : vector<1x32xf32> to vector<2x32xf32>
    %467 = arith.mulf %464, %466 : vector<2x32xf32>
    %cst_144 = arith.constant dense<0.000000e+00> : vector<2xf32>
    %468 = vector.multi_reduction <add>, %467, %cst_144 [1] : vector<2x32xf32> to vector<2xf32>
    %469 = vector.shape_cast %468 : vector<2xf32> to vector<2x1xf32>
    %c0_145 = arith.constant 0 : index
    %c0_146 = arith.constant 0 : index
    %470 = vector.load %arg6[%c0_145, %c0_146] : memref<1x1xf32, #tpu.memory_space<vmem>>, vector<1x1xf32>
    %471 = vector.broadcast %470 : vector<1x1xf32> to vector<2x1xf32>
    %472 = arith.addf %469, %471 : vector<2x1xf32>
    %c0_147 = arith.constant 0 : index
    %c0_148 = arith.constant 0 : index
    %473 = vector.load %arg7[%c0_147, %c0_148] : memref<2x1xf32, #tpu.memory_space<vmem>>, vector<2x1xf32>
    tpu.vector_store %arg7[%c0_147, %c0_148], %472 {strides = array<i32>} : memref<2x1xf32, #tpu.memory_space<vmem>>, vector<2x1xf32>,
    return
  }
}

</mosaic_0001>

<llo_original>
// kernel: lstm_model_forward.1
$region0: #{lstm_model_forward.1}
  #allocation0 [shape = 'u32[]', space=smem, size = 0x4, offset = 0x4, fixed_abs, tag = 'smem constant byte address 0x4 - core index']
  #allocation1 [shape = 'u32[144,128]{1,0:T(1,128)}', space=vmem, size = 0x12000, scoped, tag = 'internal scratch']
  #allocation2 [shape = 'f32[1,1]{1,0:T(1,128)S(1)}', space=vmem, size = 0x200, scoped, tag = 'scoped memory for lstm_model_forward.1']
  %s0 = inlined_call_operand.vmem [shape: f32[8,2,32], index: 0, kind: input, shape index: {}]
  %s1 = inlined_call_operand.vmem [shape: f32[64,128], index: 1, kind: input, shape index: {}]
  %s2 = inlined_call_operand.hbm [shape: f32[64,128], index: 2, kind: input, shape index: {}]
  %s3 = inlined_call_operand.vmem [shape: f32[1,128], index: 3, kind: input, shape index: {}]
  %s4 = inlined_call_operand.vmem [shape: f32[1,128], index: 4, kind: input, shape index: {}]
  %s5 = inlined_call_operand.vmem [shape: f32[1,32], index: 5, kind: input, shape index: {}]
  %s6 = inlined_call_operand.<no memory space> [shape: f32[1,1], index: 6, kind: input, shape index: {}]
  %s7 = inlined_call_operand.vmem [shape: f32[2,1], index: 7, kind: output, shape index: {}]
  %s8 = sld [smem:[#allocation0]]
  $region42: #{lstm_model_forward.1} parent=0
    _
  %s10 = ssub.s32 1, %s8
  %s11 = scalar_select 0, %s10, %s8
  %v12 = vstv %s6
  %13 = vst [vmem:[#allocation2] sm:$0x1] %v12
  $region1: #{lstm_model_forward.1} parent=0
    #allocation3 [shape = 'u8[32768]{0}', space=vmem, size = 0x8000, scoped, tag = 'input window, operand 2, single buffered']
    #allocation4 [shape = 's32[1]{0}', space=sflag, size = 0x4, scoped, tag = 'scoped memory for lstm_model_forward.1']
    %14 = vsyncpa [#allocation4], 0
    // Predicated region
    $region2: #{lstm_model_forward.1} parent=1 // pred_check
      _
    $region3: #{lstm_model_forward.1} parent=1 // pred_check_branch
      %16 = sbr.rel (0) target = $region5
    $region4: #{lstm_model_forward.1} parent=1 // pred_region
      _
    $region5: #{lstm_model_forward.1} parent=1 // pred_fallthru
      _
    // Predicated region
    $region6: #{lstm_model_forward.1} parent=1 // pred_check
      _
    $region7: #{lstm_model_forward.1} parent=1 // pred_check_branch
      %18 = sbr.rel (0) target = $region9
    $region8: #{lstm_model_forward.1} parent=1 // pred_region
      _
    $region9: #{lstm_model_forward.1} parent=1 // pred_fallthru
      _
    // Predicated region
    $region10: #{lstm_model_forward.1} parent=1 // pred_check
      _
    $region11: #{lstm_model_forward.1} parent=1 // pred_check_branch
      %20 = sbr.rel (0) target = $region13
    $region12: #{lstm_model_forward.1} parent=1 // pred_region
      %s22 = ssub.s32 1024, 1024
      %23 = vsyncadd [#allocation4], %s22
      %s24 = sshll.u32 [#allocation3], 4
      %s25 = int_to_ptr.vmem [resolvable:$true] %s24
      %30 = dma.hbm_to_vmem [thread:$0]  %s2, 1024, %s25, [#allocation4], 128, 128, 8
    $region13: #{lstm_model_forward.1} parent=1 // pred_fallthru
      _
    // Predicated region
    $region14: #{lstm_model_forward.1} parent=1 // pred_check
      _
    $region15: #{lstm_model_forward.1} parent=1 // pred_check_branch
      %32 = sbr.rel (0) target = $region17
    $region16: #{lstm_model_forward.1} parent=1 // pred_region
      _
    $region17: #{lstm_model_forward.1} parent=1 // pred_fallthru
      _
    // Predicated region
    $region18: #{lstm_model_forward.1} parent=1 // pred_check
      _
    $region19: #{lstm_model_forward.1} parent=1 // pred_check_branch
      %34 = sbr.rel (0) target = $region21
    $region20: #{lstm_model_forward.1} parent=1 // pred_region
      _
    $region21: #{lstm_model_forward.1} parent=1 // pred_fallthru
      _
    // Predicated region
    $region22: #{lstm_model_forward.1} parent=1 // pred_check
      _
    $region23: #{lstm_model_forward.1} parent=1 // pred_check_branch
      %36 = sbr.rel (0) target = $region25
    $region24: #{lstm_model_forward.1} parent=1 // pred_region
      _
    $region25: #{lstm_model_forward.1} parent=1 // pred_fallthru
      _
    // Predicated region
    $region26: #{lstm_model_forward.1} parent=1 // pred_check
      _
    $region27: #{lstm_model_forward.1} parent=1 // pred_check_branch
      %38 = sbr.rel (0) target = $region29
    $region28: #{lstm_model_forward.1} parent=1 // pred_region
      _
    $region29: #{lstm_model_forward.1} parent=1 // pred_fallthru
      _
    // Predicated region
    $region30: #{lstm_model_forward.1} parent=1 // pred_check
      _
    $region31: #{lstm_model_forward.1} parent=1 // pred_check_branch
      %40 = sbr.rel (0) target = $region33
    $region32: #{lstm_model_forward.1} parent=1 // pred_region
      %41 = dma.done [#allocation4], 1024
    $region33: #{lstm_model_forward.1} parent=1 // pred_fallthru
      _
    %v42 = vld [vmem:[%s0] sm:$0x3]
    %vm43 = vcmask 261120
    %v44 = vsel %vm43, %v42, 0.0
    %v45 = vld [vmem:[%s1] sm:$0xff]
    %v46 = vld [vmem:[%s1 + $0x8] sm:$0xff]
    %v47 = vld [vmem:[%s1 + $0x10] sm:$0xff]
    %v48 = vld [vmem:[%s1 + $0x18] sm:$0xff]
    %v49 = vld [vmem:[%s1 + $0x20] sm:$0xff]
    %v50 = vld [vmem:[%s1 + $0x28] sm:$0xff]
    %v51 = vld [vmem:[%s1 + $0x30] sm:$0xff]
    %v52 = vld [vmem:[%s1 + $0x38] sm:$0xff]
    %v53 = vld [vmem:[%s3] sm:$0x1]
    %v55 = vlaneseq
    %v56 = vshrl.u32 %v55, 7
    %v57 = vsub.s32 0, %v56
    %v58 = vrot.slane %v53, %v57
    %vm60 = vcmask 523264
    %v62 = vsel %vm60, %v44, 0
    %64 = vmatprep.subr.mxu0 0.0
    %65 = vmatpush1.msra.mxu0 %v45
    %66 = vmatprep.subr.mxu0 0.0
    %67 = vmatpush1.msra.mxu0 %v46
    %68 = vmatprep.subr.mxu0 0.0
    %69 = vmatpush1.msra.mxu0 %v47
    %70 = vmatprep.subr.mxu0 0.0
    %71 = vmatpush1.msra.mxu0 %v48
    %72 = vmatprep.subr.mxu0 0.0
    %73 = vmatpush1.msra.mxu0 %v49
    %74 = vmatprep.subr.mxu0 0.0
    %75 = vmatpush1.msra.mxu0 %v50
    %76 = vmatprep.subr.mxu0 0.0
    %77 = vmatpush1.msra.mxu0 %v51
    %78 = vmatprep.subr.mxu0 0.0
    %79 = vmatpush1.msra.mxu0 %v52
    %80 = vmatprep.subr.mxu0 0.0
    %81 = vmatpush1.msra.mxu0 0.0
    %82 = vmatprep.subr.mxu0 0.0
    %83 = vmatpush1.msra.mxu0 0.0
    %84 = vmatprep.subr.mxu0 0.0
    %85 = vmatpush1.msra.mxu0 0.0
    %86 = vmatprep.subr.mxu0 0.0
    %87 = vmatpush1.msra.mxu0 0.0
    %88 = vmatprep.subr.mxu0 0.0
    %89 = vmatpush1.msra.mxu0 0.0
    %90 = vmatprep.subr.mxu0 0.0
    %91 = vmatpush1.msra.mxu0 0.0
    %92 = vmatprep.subr.mxu0 0.0
    %93 = vmatpush1.msra.mxu0 0.0
    %94 = vmatprep.subr.mxu0 0.0
    %95 = vmatpush1.msra.mxu0 0.0
    %96 = vmatprep.subr.mxu0 0.0
    %97 = vmatpush1.msra.mxu0 0.0
    %98 = vmatprep.subr.mxu0 0.0
    %99 = vmatpush1.msra.mxu0 0.0
    %100 = vmatprep.subr.mxu0 0.0
    %101 = vmatpush1.msra.mxu0 0.0
    %102 = vmatprep.subr.mxu0 0.0
    %103 = vmatpush1.msra.mxu0 0.0
    %104 = vmatprep.subr.mxu0 0.0
    %105 = vmatpush1.msra.mxu0 0.0
    %106 = vmatprep.subr.mxu0 0.0
    %107 = vmatpush1.msra.mxu0 0.0
    %108 = vmatprep.subr.mxu0 0.0
    %109 = vmatpush1.msra.mxu0 0.0
    %110 = vmatprep.subr.mxu0 0.0
    %111 = vmatpush1.msra.mxu0 0.0
    %112 = vmatprep.subr.mxu0 0.0
    %113 = vmatpush1.msra.mxu0 0.0
    %114 = vmatprep.subr.mxu0 0.0
    %115 = vmatpush1.msra.mxu0 0.0
    %116 = vmatprep.subr.mxu0 0.0
    %117 = vmatpush1.msra.mxu0 0.0
    %118 = vmatprep.subr.mxu0 0.0
    %119 = vmatpush1.msra.mxu0 0.0
    %120 = vmatprep.subr.mxu0 0.0
    %121 = vmatpush1.msra.mxu0 0.0
    %122 = vmatprep.subr.mxu0 0.0
    %123 = vmatpush1.msra.mxu0 0.0
    %124 = vmatprep.subr.mxu0 0.0
    %125 = vmatpush1.msra.mxu0 0.0
    %126 = vmatprep.subr.mxu0 0.0
    %127 = vmatpush1.msra.mxu0 0.0
    %128 = vmatprep.mubr.f32.mxu0 0.0
    %129 = vmatmul.mubr.f32.gmra.mrb[0].mxu0 %v62
    %v130 = vpop.f32.mrb[0].mxu0
    %v131 = vadd.f32 %v58, %v130
    %v132 = vpop.f32.mrb[0].mxu0
    %133 = vdwg.mxu0
    %v134 = vxor.u32 %v131, 2147483648
    %v135 = vmul.f32 %v134, 1.442695
    %v136 = vpow.pop %v135
    %v137 = vadd.f32 %v136, 1.0
    %v138 = vrcp.pop %v137
    %v139 = vmul.f32 1.0, %v138
    %v140 = vtanh.pop %v131
    %v141 = vlaneseq
    %v142 = vand.u32 %v141, 127
    %vm143 = vcmp.ge.s32.totalorder %v142, 64
    %vm144 = vcmp.lt.s32.totalorder %v142, 96
    %vm145 = vmand %vm143, %vm144
    %v146 = vsel %vm145, %v140, %v139
    %v147 = vmul.f32 %v146, 0.0
    %149 = vrot.lane.b32.xlu0 %v146, 64
    %v150 = vpop.permute.xlu0 %149
    %v152 = vmul.f32 %v146, %v150
    %154 = vrot.lane.b32.xlu0 %v152, 32
    %v155 = vpop.permute.xlu0 %154
    %v157 = vadd.f32 %v147, %v155
    %v158 = vtanh.pop %v157
    %160 = vrot.lane.b32.xlu0 %v158, 64
    %v161 = vpop.permute.xlu0 %160
    %v163 = vmul.f32 %v146, %v161
    %165 = vrot.lane.b32.xlu0 %v163, 32
    %v166 = vpop.permute.xlu0 %165
    %v168 = vsel %vm43, %v166, 0.0
    %v169 = vld [vmem:[#allocation3] sm:$0xff]
    %v170 = vld [vmem:[#allocation3 + $0x8] sm:$0xff]
    %v171 = vld [vmem:[#allocation3 + $0x10] sm:$0xff]
    %v172 = vld [vmem:[#allocation3 + $0x18] sm:$0xff]
    %v173 = vld [vmem:[#allocation3 + $0x20] sm:$0xff]
    %v174 = vld [vmem:[#allocation3 + $0x28] sm:$0xff]
    %v175 = vld [vmem:[#allocation3 + $0x30] sm:$0xff]
    %v176 = vld [vmem:[#allocation3 + $0x38] sm:$0xff]
    %v177 = vld [vmem:[%s4] sm:$0x1]
    %v179 = vlaneseq
    %v180 = vshrl.u32 %v179, 7
    %v181 = vsub.s32 0, %v180
    %v182 = vrot.slane %v177, %v181
    %v185 = vsel %vm60, %v168, 0
    %187 = vmatprep.subr.mxu0 0.0
    %188 = vmatpush1.msra.mxu0 %v169
    %189 = vmatprep.subr.mxu0 0.0
    %190 = vmatpush1.msra.mxu0 %v170
    %191 = vmatprep.subr.mxu0 0.0
    %192 = vmatpush1.msra.mxu0 %v171
    %193 = vmatprep.subr.mxu0 0.0
    %194 = vmatpush1.msra.mxu0 %v172
    %195 = vmatprep.subr.mxu0 0.0
    %196 = vmatpush1.msra.mxu0 %v173
    %197 = vmatprep.subr.mxu0 0.0
    %198 = vmatpush1.msra.mxu0 %v174
    %199 = vmatprep.subr.mxu0 0.0
    %200 = vmatpush1.msra.mxu0 %v175
    %201 = vmatprep.subr.mxu0 0.0
    %202 = vmatpush1.msra.mxu0 %v176
    %203 = vmatprep.subr.mxu0 0.0
    %204 = vmatpush1.msra.mxu0 0.0
    %205 = vmatprep.subr.mxu0 0.0
    %206 = vmatpush1.msra.mxu0 0.0
    %207 = vmatprep.subr.mxu0 0.0
    %208 = vmatpush1.msra.mxu0 0.0
    %209 = vmatprep.subr.mxu0 0.0
    %210 = vmatpush1.msra.mxu0 0.0
    %211 = vmatprep.subr.mxu0 0.0
    %212 = vmatpush1.msra.mxu0 0.0
    %213 = vmatprep.subr.mxu0 0.0
    %214 = vmatpush1.msra.mxu0 0.0
    %215 = vmatprep.subr.mxu0 0.0
    %216 = vmatpush1.msra.mxu0 0.0
    %217 = vmatprep.subr.mxu0 0.0
    %218 = vmatpush1.msra.mxu0 0.0
    %219 = vmatprep.subr.mxu0 0.0
    %220 = vmatpush1.msra.mxu0 0.0
    %221 = vmatprep.subr.mxu0 0.0
    %222 = vmatpush1.msra.mxu0 0.0
    %223 = vmatprep.subr.mxu0 0.0
    %224 = vmatpush1.msra.mxu0 0.0
    %225 = vmatprep.subr.mxu0 0.0
    %226 = vmatpush1.msra.mxu0 0.0
    %227 = vmatprep.subr.mxu0 0.0
    %228 = vmatpush1.msra.mxu0 0.0
    %229 = vmatprep.subr.mxu0 0.0
    %230 = vmatpush1.msra.mxu0 0.0
    %231 = vmatprep.subr.mxu0 0.0
    %232 = vmatpush1.msra.mxu0 0.0
    %233 = vmatprep.subr.mxu0 0.0
    %234 = vmatpush1.msra.mxu0 0.0
    %235 = vmatprep.subr.mxu0 0.0
    %236 = vmatpush1.msra.mxu0 0.0
    %237 = vmatprep.subr.mxu0 0.0
    %238 = vmatpush1.msra.mxu0 0.0
    %239 = vmatprep.subr.mxu0 0.0
    %240 = vmatpush1.msra.mxu0 0.0
    %241 = vmatprep.subr.mxu0 0.0
    %242 = vmatpush1.msra.mxu0 0.0
    %243 = vmatprep.subr.mxu0 0.0
    %244 = vmatpush1.msra.mxu0 0.0
    %245 = vmatprep.subr.mxu0 0.0
    %246 = vmatpush1.msra.mxu0 0.0
    %247 = vmatprep.subr.mxu0 0.0
    %248 = vmatpush1.msra.mxu0 0.0
    %249 = vmatprep.subr.mxu0 0.0
    %250 = vmatpush1.msra.mxu0 0.0
    %251 = vmatprep.mubr.f32.mxu0 0.0
    %252 = vmatmul.mubr.f32.gmra.mrb[0].mxu0 %v185
    %v253 = vpop.f32.mrb[0].mxu0
    %v254 = vadd.f32 %v182, %v253
    %v255 = vpop.f32.mrb[0].mxu0
    %256 = vdwg.mxu0
    %v257 = vxor.u32 %v254, 2147483648
    %v258 = vmul.f32 %v257, 1.442695
    %v259 = vpow.pop %v258
    %v260 = vadd.f32 %v259, 1.0
    %v261 = vrcp.pop %v260
    %v262 = vmul.f32 1.0, %v261
    %v263 = vtanh.pop %v254
    %v264 = vsel %vm145, %v263, %v262
    %v265 = vmul.f32 %v264, 0.0
    %267 = vrot.lane.b32.xlu0 %v264, 64
    %v268 = vpop.permute.xlu0 %267
    %v270 = vmul.f32 %v264, %v268
    %272 = vrot.lane.b32.xlu0 %v270, 32
    %v273 = vpop.permute.xlu0 %272
    %v275 = vadd.f32 %v265, %v273
    %v276 = vtanh.pop %v275
    %278 = vrot.lane.b32.xlu0 %v276, 64
    %v279 = vpop.permute.xlu0 %278
    %v281 = vmul.f32 %v264, %v279
    %s282 = scalar_lea.vmem %s0, 2
    %v283 = vld [vmem:[%s282] sm:$0x3]
    %284 = vrot.lane.b32.xlu0 %v163, 64
    %v285 = vpop.permute.xlu0 %284
    %v287 = vsel %vm43, %v283, %v285
    %v289 = vsel %vm60, %v287, 0
    %291 = vmatprep.subr.mxu0 0.0
    %292 = vmatpush1.msra.mxu0 %v45
    %293 = vmatprep.subr.mxu0 0.0
    %294 = vmatpush1.msra.mxu0 %v46
    %295 = vmatprep.subr.mxu0 0.0
    %296 = vmatpush1.msra.mxu0 %v47
    %297 = vmatprep.subr.mxu0 0.0
    %298 = vmatpush1.msra.mxu0 %v48
    %299 = vmatprep.subr.mxu0 0.0
    %300 = vmatpush1.msra.mxu0 %v49
    %301 = vmatprep.subr.mxu0 0.0
    %302 = vmatpush1.msra.mxu0 %v50
    %303 = vmatprep.subr.mxu0 0.0
    %304 = vmatpush1.msra.mxu0 %v51
    %305 = vmatprep.subr.mxu0 0.0
    %306 = vmatpush1.msra.mxu0 %v52
    %307 = vmatprep.subr.mxu0 0.0
    %308 = vmatpush1.msra.mxu0 0.0
    %309 = vmatprep.subr.mxu0 0.0
    %310 = vmatpush1.msra.mxu0 0.0
    %311 = vmatprep.subr.mxu0 0.0
    %312 = vmatpush1.msra.mxu0 0.0
    %313 = vmatprep.subr.mxu0 0.0
    %314 = vmatpush1.msra.mxu0 0.0
    %315 = vmatprep.subr.mxu0 0.0
    %316 = vmatpush1.msra.mxu0 0.0
    %317 = vmatprep.subr.mxu0 0.0
    %318 = vmatpush1.msra.mxu0 0.0
    %319 = vmatprep.subr.mxu0 0.0
    %320 = vmatpush1.msra.mxu0 0.0
    %321 = vmatprep.subr.mxu0 0.0
    %322 = vmatpush1.msra.mxu0 0.0
    %323 = vmatprep.subr.mxu0 0.0
    %324 = vmatpush1.msra.mxu0 0.0
    %325 = vmatprep.subr.mxu0 0.0
    %326 = vmatpush1.msra.mxu0 0.0
    %327 = vmatprep.subr.mxu0 0.0
    %328 = vmatpush1.msra.mxu0 0.0
    %329 = vmatprep.subr.mxu0 0.0
    %330 = vmatpush1.msra.mxu0 0.0
    %331 = vmatprep.subr.mxu0 0.0
    %332 = vmatpush1.msra.mxu0 0.0
    %333 = vmatprep.subr.mxu0 0.0
    %334 = vmatpush1.msra.mxu0 0.0
    %335 = vmatprep.subr.mxu0 0.0
    %336 = vmatpush1.msra.mxu0 0.0
    %337 = vmatprep.subr.mxu0 0.0
    %338 = vmatpush1.msra.mxu0 0.0
    %339 = vmatprep.subr.mxu0 0.0
    %340 = vmatpush1.msra.mxu0 0.0
    %341 = vmatprep.subr.mxu0 0.0
    %342 = vmatpush1.msra.mxu0 0.0
    %343 = vmatprep.subr.mxu0 0.0
    %344 = vmatpush1.msra.mxu0 0.0
    %345 = vmatprep.subr.mxu0 0.0
    %346 = vmatpush1.msra.mxu0 0.0
    %347 = vmatprep.subr.mxu0 0.0
    %348 = vmatpush1.msra.mxu0 0.0
    %349 = vmatprep.subr.mxu0 0.0
    %350 = vmatpush1.msra.mxu0 0.0
    %351 = vmatprep.subr.mxu0 0.0
    %352 = vmatpush1.msra.mxu0 0.0
    %353 = vmatprep.subr.mxu0 0.0
    %354 = vmatpush1.msra.mxu0 0.0
    %355 = vmatprep.mubr.f32.mxu0 0.0
    %356 = vmatmul.mubr.f32.gmra.mrb[0].mxu0 %v289
    %v357 = vpop.f32.mrb[0].mxu0
    %v358 = vadd.f32 %v58, %v357
    %v359 = vpop.f32.mrb[0].mxu0
    %360 = vdwg.mxu0
    %v361 = vxor.u32 %v358, 2147483648
    %v362 = vmul.f32 %v361, 1.442695
    %v363 = vpow.pop %v362
    %v364 = vadd.f32 %v363, 1.0
    %v365 = vrcp.pop %v364
    %v366 = vmul.f32 1.0, %v365
    %v367 = vtanh.pop %v358
    %v368 = vsel %vm145, %v367, %v366
    %v369 = vmul.f32 %v368, %v157
    %371 = vrot.lane.b32.xlu0 %v368, 64
    %v372 = vpop.permute.xlu0 %371
    %v374 = vmul.f32 %v368, %v372
    %376 = vrot.lane.b32.xlu0 %v374, 32
    %v377 = vpop.permute.xlu0 %376
    %v379 = vadd.f32 %v369, %v377
    %v380 = vtanh.pop %v379
    %382 = vrot.lane.b32.xlu0 %v380, 64
    %v383 = vpop.permute.xlu0 %382
    %v385 = vmul.f32 %v368, %v383
    %387 = vrot.lane.b32.xlu0 %v385, 32
    %v388 = vpop.permute.xlu0 %387
    %391 = vrot.lane.b32.xlu0 %v281, 64
    %v392 = vpop.permute.xlu0 %391
    %v394 = vsel %vm43, %v388, %v392
    %v396 = vsel %vm60, %v394, 0
    %398 = vmatprep.subr.mxu0 0.0
    %399 = vmatpush1.msra.mxu0 %v169
    %400 = vmatprep.subr.mxu0 0.0
    %401 = vmatpush1.msra.mxu0 %v170
    %402 = vmatprep.subr.mxu0 0.0
    %403 = vmatpush1.msra.mxu0 %v171
    %404 = vmatprep.subr.mxu0 0.0
    %405 = vmatpush1.msra.mxu0 %v172
    %406 = vmatprep.subr.mxu0 0.0
    %407 = vmatpush1.msra.mxu0 %v173
    %408 = vmatprep.subr.mxu0 0.0
    %409 = vmatpush1.msra.mxu0 %v174
    %410 = vmatprep.subr.mxu0 0.0
    %411 = vmatpush1.msra.mxu0 %v175
    %412 = vmatprep.subr.mxu0 0.0
    %413 = vmatpush1.msra.mxu0 %v176
    %414 = vmatprep.subr.mxu0 0.0
    %415 = vmatpush1.msra.mxu0 0.0
    %416 = vmatprep.subr.mxu0 0.0
    %417 = vmatpush1.msra.mxu0 0.0
    %418 = vmatprep.subr.mxu0 0.0
    %419 = vmatpush1.msra.mxu0 0.0
    %420 = vmatprep.subr.mxu0 0.0
    %421 = vmatpush1.msra.mxu0 0.0
    %422 = vmatprep.subr.mxu0 0.0
    %423 = vmatpush1.msra.mxu0 0.0
    %424 = vmatprep.subr.mxu0 0.0
    %425 = vmatpush1.msra.mxu0 0.0
    %426 = vmatprep.subr.mxu0 0.0
    %427 = vmatpush1.msra.mxu0 0.0
    %428 = vmatprep.subr.mxu0 0.0
    %429 = vmatpush1.msra.mxu0 0.0
    %430 = vmatprep.subr.mxu0 0.0
    %431 = vmatpush1.msra.mxu0 0.0
    %432 = vmatprep.subr.mxu0 0.0
    %433 = vmatpush1.msra.mxu0 0.0
    %434 = vmatprep.subr.mxu0 0.0
    %435 = vmatpush1.msra.mxu0 0.0
    %436 = vmatprep.subr.mxu0 0.0
    %437 = vmatpush1.msra.mxu0 0.0
    %438 = vmatprep.subr.mxu0 0.0
    %439 = vmatpush1.msra.mxu0 0.0
    %440 = vmatprep.subr.mxu0 0.0
    %441 = vmatpush1.msra.mxu0 0.0
    %442 = vmatprep.subr.mxu0 0.0
    %443 = vmatpush1.msra.mxu0 0.0
    %444 = vmatprep.subr.mxu0 0.0
    %445 = vmatpush1.msra.mxu0 0.0
    %446 = vmatprep.subr.mxu0 0.0
    %447 = vmatpush1.msra.mxu0 0.0
    %448 = vmatprep.subr.mxu0 0.0
    %449 = vmatpush1.msra.mxu0 0.0
    %450 = vmatprep.subr.mxu0 0.0
    %451 = vmatpush1.msra.mxu0 0.0
    %452 = vmatprep.subr.mxu0 0.0
    %453 = vmatpush1.msra.mxu0 0.0
    %454 = vmatprep.subr.mxu0 0.0
    %455 = vmatpush1.msra.mxu0 0.0
    %456 = vmatprep.subr.mxu0 0.0
    %457 = vmatpush1.msra.mxu0 0.0
    %458 = vmatprep.subr.mxu0 0.0
    %459 = vmatpush1.msra.mxu0 0.0
    %460 = vmatprep.subr.mxu0 0.0
    %461 = vmatpush1.msra.mxu0 0.0
    %462 = vmatprep.mubr.f32.mxu0 0.0
    %463 = vmatmul.mubr.f32.gmra.mrb[0].mxu0 %v396
    %v464 = vpop.f32.mrb[0].mxu0
    %v465 = vadd.f32 %v182, %v464
    %v466 = vpop.f32.mrb[0].mxu0
    %467 = vdwg.mxu0
    %v468 = vxor.u32 %v465, 2147483648
    %v469 = vmul.f32 %v468, 1.442695
    %v470 = vpow.pop %v469
    %v471 = vadd.f32 %v470, 1.0
    %v472 = vrcp.pop %v471
    %v473 = vmul.f32 1.0, %v472
    %v474 = vtanh.pop %v465
    %v475 = vsel %vm145, %v474, %v473
    %v476 = vmul.f32 %v475, %v275
    %478 = vrot.lane.b32.xlu0 %v475, 64
    %v479 = vpop.permute.xlu0 %478
    %v481 = vmul.f32 %v475, %v479
    %483 = vrot.lane.b32.xlu0 %v481, 32
    %v484 = vpop.permute.xlu0 %483
    %v486 = vadd.f32 %v476, %v484
    %v487 = vtanh.pop %v486
    %489 = vrot.lane.b32.xlu0 %v487, 64
    %v490 = vpop.permute.xlu0 %489
    %v492 = vmul.f32 %v475, %v490
    %s493 = scalar_lea.vmem %s0, 4
    %v494 = vld [vmem:[%s493] sm:$0x3]
    %495 = vrot.lane.b32.xlu0 %v385, 64
    %v496 = vpop.permute.xlu0 %495
    %v498 = vsel %vm43, %v494, %v496
    %v500 = vsel %vm60, %v498, 0
    %502 = vmatprep.subr.mxu0 0.0
    %503 = vmatpush1.msra.mxu0 %v45
    %504 = vmatprep.subr.mxu0 0.0
    %505 = vmatpush1.msra.mxu0 %v46
    %506 = vmatprep.subr.mxu0 0.0
    %507 = vmatpush1.msra.mxu0 %v47
    %508 = vmatprep.subr.mxu0 0.0
    %509 = vmatpush1.msra.mxu0 %v48
    %510 = vmatprep.subr.mxu0 0.0
    %511 = vmatpush1.msra.mxu0 %v49
    %512 = vmatprep.subr.mxu0 0.0
    %513 = vmatpush1.msra.mxu0 %v50
    %514 = vmatprep.subr.mxu0 0.0
    %515 = vmatpush1.msra.mxu0 %v51
    %516 = vmatprep.subr.mxu0 0.0
    %517 = vmatpush1.msra.mxu0 %v52
    %518 = vmatprep.subr.mxu0 0.0
    %519 = vmatpush1.msra.mxu0 0.0
    %520 = vmatprep.subr.mxu0 0.0
    %521 = vmatpush1.msra.mxu0 0.0
    %522 = vmatprep.subr.mxu0 0.0
    %523 = vmatpush1.msra.mxu0 0.0
    %524 = vmatprep.subr.mxu0 0.0
    %525 = vmatpush1.msra.mxu0 0.0
    %526 = vmatprep.subr.mxu0 0.0
    %527 = vmatpush1.msra.mxu0 0.0
    %528 = vmatprep.subr.mxu0 0.0
    %529 = vmatpush1.msra.mxu0 0.0
    %530 = vmatprep.subr.mxu0 0.0
    %531 = vmatpush1.msra.mxu0 0.0
    %532 = vmatprep.subr.mxu0 0.0
    %533 = vmatpush1.msra.mxu0 0.0
    %534 = vmatprep.subr.mxu0 0.0
    %535 = vmatpush1.msra.mxu0 0.0
    %536 = vmatprep.subr.mxu0 0.0
    %537 = vmatpush1.msra.mxu0 0.0
    %538 = vmatprep.subr.mxu0 0.0
    %539 = vmatpush1.msra.mxu0 0.0
    %540 = vmatprep.subr.mxu0 0.0
    %541 = vmatpush1.msra.mxu0 0.0
    %542 = vmatprep.subr.mxu0 0.0
    %543 = vmatpush1.msra.mxu0 0.0
    %544 = vmatprep.subr.mxu0 0.0
    %545 = vmatpush1.msra.mxu0 0.0
    %546 = vmatprep.subr.mxu0 0.0
    %547 = vmatpush1.msra.mxu0 0.0
    %548 = vmatprep.subr.mxu0 0.0
    %549 = vmatpush1.msra.mxu0 0.0
    %550 = vmatprep.subr.mxu0 0.0
    %551 = vmatpush1.msra.mxu0 0.0
    %552 = vmatprep.subr.mxu0 0.0
    %553 = vmatpush1.msra.mxu0 0.0
    %554 = vmatprep.subr.mxu0 0.0
    %555 = vmatpush1.msra.mxu0 0.0
    %556 = vmatprep.subr.mxu0 0.0
    %557 = vmatpush1.msra.mxu0 0.0
    %558 = vmatprep.subr.mxu0 0.0
    %559 = vmatpush1.msra.mxu0 0.0
    %560 = vmatprep.subr.mxu0 0.0
    %561 = vmatpush1.msra.mxu0 0.0
    %562 = vmatprep.subr.mxu0 0.0
    %563 = vmatpush1.msra.mxu0 0.0
    %564 = vmatprep.subr.mxu0 0.0
    %565 = vmatpush1.msra.mxu0 0.0
    %566 = vmatprep.mubr.f32.mxu0 0.0
    %567 = vmatmul.mubr.f32.gmra.mrb[0].mxu0 %v500
    %v568 = vpop.f32.mrb[0].mxu0
    %v569 = vadd.f32 %v58, %v568
    %v570 = vpop.f32.mrb[0].mxu0
    %571 = vdwg.mxu0
    %v572 = vxor.u32 %v569, 2147483648
    %v573 = vmul.f32 %v572, 1.442695
    %v574 = vpow.pop %v573
    %v575 = vadd.f32 %v574, 1.0
    %v576 = vrcp.pop %v575
    %v577 = vmul.f32 1.0, %v576
    %v578 = vtanh.pop %v569
    %v579 = vsel %vm145, %v578, %v577
    %v580 = vmul.f32 %v579, %v379
    %582 = vrot.lane.b32.xlu0 %v579, 64
    %v583 = vpop.permute.xlu0 %582
    %v585 = vmul.f32 %v579, %v583
    %587 = vrot.lane.b32.xlu0 %v585, 32
    %v588 = vpop.permute.xlu0 %587
    %v590 = vadd.f32 %v580, %v588
    %v591 = vtanh.pop %v590
    %593 = vrot.lane.b32.xlu0 %v591, 64
    %v594 = vpop.permute.xlu0 %593
    %v596 = vmul.f32 %v579, %v594
    %598 = vrot.lane.b32.xlu0 %v596, 32
    %v599 = vpop.permute.xlu0 %598
    %602 = vrot.lane.b32.xlu0 %v492, 64
    %v603 = vpop.permute.xlu0 %602
    %v605 = vsel %vm43, %v599, %v603
    %v607 = vsel %vm60, %v605, 0
    %609 = vmatprep.subr.mxu0 0.0
    %610 = vmatpush1.msra.mxu0 %v169
    %611 = vmatprep.subr.mxu0 0.0
    %612 = vmatpush1.msra.mxu0 %v170
    %613 = vmatprep.subr.mxu0 0.0
    %614 = vmatpush1.msra.mxu0 %v171
    %615 = vmatprep.subr.mxu0 0.0
    %616 = vmatpush1.msra.mxu0 %v172
    %617 = vmatprep.subr.mxu0 0.0
    %618 = vmatpush1.msra.mxu0 %v173
    %619 = vmatprep.subr.mxu0 0.0
    %620 = vmatpush1.msra.mxu0 %v174
    %621 = vmatprep.subr.mxu0 0.0
    %622 = vmatpush1.msra.mxu0 %v175
    %623 = vmatprep.subr.mxu0 0.0
    %624 = vmatpush1.msra.mxu0 %v176
    %625 = vmatprep.subr.mxu0 0.0
    %626 = vmatpush1.msra.mxu0 0.0
    %627 = vmatprep.subr.mxu0 0.0
    %628 = vmatpush1.msra.mxu0 0.0
    %629 = vmatprep.subr.mxu0 0.0
    %630 = vmatpush1.msra.mxu0 0.0
    %631 = vmatprep.subr.mxu0 0.0
    %632 = vmatpush1.msra.mxu0 0.0
    %633 = vmatprep.subr.mxu0 0.0
    %634 = vmatpush1.msra.mxu0 0.0
    %635 = vmatprep.subr.mxu0 0.0
    %636 = vmatpush1.msra.mxu0 0.0
    %637 = vmatprep.subr.mxu0 0.0
    %638 = vmatpush1.msra.mxu0 0.0
    %639 = vmatprep.subr.mxu0 0.0
    %640 = vmatpush1.msra.mxu0 0.0
    %641 = vmatprep.subr.mxu0 0.0
    %642 = vmatpush1.msra.mxu0 0.0
    %643 = vmatprep.subr.mxu0 0.0
    %644 = vmatpush1.msra.mxu0 0.0
    %645 = vmatprep.subr.mxu0 0.0
    %646 = vmatpush1.msra.mxu0 0.0
    %647 = vmatprep.subr.mxu0 0.0
    %648 = vmatpush1.msra.mxu0 0.0
    %649 = vmatprep.subr.mxu0 0.0
    %650 = vmatpush1.msra.mxu0 0.0
    %651 = vmatprep.subr.mxu0 0.0
    %652 = vmatpush1.msra.mxu0 0.0
    %653 = vmatprep.subr.mxu0 0.0
    %654 = vmatpush1.msra.mxu0 0.0
    %655 = vmatprep.subr.mxu0 0.0
    %656 = vmatpush1.msra.mxu0 0.0
    %657 = vmatprep.subr.mxu0 0.0
    %658 = vmatpush1.msra.mxu0 0.0
    %659 = vmatprep.subr.mxu0 0.0
    %660 = vmatpush1.msra.mxu0 0.0
    %661 = vmatprep.subr.mxu0 0.0
    %662 = vmatpush1.msra.mxu0 0.0
    %663 = vmatprep.subr.mxu0 0.0
    %664 = vmatpush1.msra.mxu0 0.0
    %665 = vmatprep.subr.mxu0 0.0
    %666 = vmatpush1.msra.mxu0 0.0
    %667 = vmatprep.subr.mxu0 0.0
    %668 = vmatpush1.msra.mxu0 0.0
    %669 = vmatprep.subr.mxu0 0.0
    %670 = vmatpush1.msra.mxu0 0.0
    %671 = vmatprep.subr.mxu0 0.0
    %672 = vmatpush1.msra.mxu0 0.0
    %673 = vmatprep.mubr.f32.mxu0 0.0
    %674 = vmatmul.mubr.f32.gmra.mrb[0].mxu0 %v607
    %v675 = vpop.f32.mrb[0].mxu0
    %v676 = vadd.f32 %v182, %v675
    %v677 = vpop.f32.mrb[0].mxu0
    %678 = vdwg.mxu0
    %v679 = vxor.u32 %v676, 2147483648
    %v680 = vmul.f32 %v679, 1.442695
    %v681 = vpow.pop %v680
    %v682 = vadd.f32 %v681, 1.0
    %v683 = vrcp.pop %v682
    %v684 = vmul.f32 1.0, %v683
    %v685 = vtanh.pop %v676
    %v686 = vsel %vm145, %v685, %v684
    %v687 = vmul.f32 %v686, %v486
    %689 = vrot.lane.b32.xlu0 %v686, 64
    %v690 = vpop.permute.xlu0 %689
    %v692 = vmul.f32 %v686, %v690
    %694 = vrot.lane.b32.xlu0 %v692, 32
    %v695 = vpop.permute.xlu0 %694
    %v697 = vadd.f32 %v687, %v695
    %v698 = vtanh.pop %v697
    %700 = vrot.lane.b32.xlu0 %v698, 64
    %v701 = vpop.permute.xlu0 %700
    %v703 = vmul.f32 %v686, %v701
    %s704 = scalar_lea.vmem %s0, 6
    %v705 = vld [vmem:[%s704] sm:$0x3]
    %706 = vrot.lane.b32.xlu0 %v596, 64
    %v707 = vpop.permute.xlu0 %706
    %v709 = vsel %vm43, %v705, %v707
    %v711 = vsel %vm60, %v709, 0
    %713 = vmatprep.subr.mxu0 0.0
    %714 = vmatpush1.msra.mxu0 %v45
    %715 = vmatprep.subr.mxu0 0.0
    %716 = vmatpush1.msra.mxu0 %v46
    %717 = vmatprep.subr.mxu0 0.0
    %718 = vmatpush1.msra.mxu0 %v47
    %719 = vmatprep.subr.mxu0 0.0
    %720 = vmatpush1.msra.mxu0 %v48
    %721 = vmatprep.subr.mxu0 0.0
    %722 = vmatpush1.msra.mxu0 %v49
    %723 = vmatprep.subr.mxu0 0.0
    %724 = vmatpush1.msra.mxu0 %v50
    %725 = vmatprep.subr.mxu0 0.0
    %726 = vmatpush1.msra.mxu0 %v51
    %727 = vmatprep.subr.mxu0 0.0
    %728 = vmatpush1.msra.mxu0 %v52
    %729 = vmatprep.subr.mxu0 0.0
    %730 = vmatpush1.msra.mxu0 0.0
    %731 = vmatprep.subr.mxu0 0.0
    %732 = vmatpush1.msra.mxu0 0.0
    %733 = vmatprep.subr.mxu0 0.0
    %734 = vmatpush1.msra.mxu0 0.0
    %735 = vmatprep.subr.mxu0 0.0
    %736 = vmatpush1.msra.mxu0 0.0
    %737 = vmatprep.subr.mxu0 0.0
    %738 = vmatpush1.msra.mxu0 0.0
    %739 = vmatprep.subr.mxu0 0.0
    %740 = vmatpush1.msra.mxu0 0.0
    %741 = vmatprep.subr.mxu0 0.0
    %742 = vmatpush1.msra.mxu0 0.0
    %743 = vmatprep.subr.mxu0 0.0
    %744 = vmatpush1.msra.mxu0 0.0
    %745 = vmatprep.subr.mxu0 0.0
    %746 = vmatpush1.msra.mxu0 0.0
    %747 = vmatprep.subr.mxu0 0.0
    %748 = vmatpush1.msra.mxu0 0.0
    %749 = vmatprep.subr.mxu0 0.0
    %750 = vmatpush1.msra.mxu0 0.0
    %751 = vmatprep.subr.mxu0 0.0
    %752 = vmatpush1.msra.mxu0 0.0
    %753 = vmatprep.subr.mxu0 0.0
    %754 = vmatpush1.msra.mxu0 0.0
    %755 = vmatprep.subr.mxu0 0.0
    %756 = vmatpush1.msra.mxu0 0.0
    %757 = vmatprep.subr.mxu0 0.0
    %758 = vmatpush1.msra.mxu0 0.0
    %759 = vmatprep.subr.mxu0 0.0
    %760 = vmatpush1.msra.mxu0 0.0
    %761 = vmatprep.subr.mxu0 0.0
    %762 = vmatpush1.msra.mxu0 0.0
    %763 = vmatprep.subr.mxu0 0.0
    %764 = vmatpush1.msra.mxu0 0.0
    %765 = vmatprep.subr.mxu0 0.0
    %766 = vmatpush1.msra.mxu0 0.0
    %767 = vmatprep.subr.mxu0 0.0
    %768 = vmatpush1.msra.mxu0 0.0
    %769 = vmatprep.subr.mxu0 0.0
    %770 = vmatpush1.msra.mxu0 0.0
    %771 = vmatprep.subr.mxu0 0.0
    %772 = vmatpush1.msra.mxu0 0.0
    %773 = vmatprep.subr.mxu0 0.0
    %774 = vmatpush1.msra.mxu0 0.0
    %775 = vmatprep.subr.mxu0 0.0
    %776 = vmatpush1.msra.mxu0 0.0
    %777 = vmatprep.mubr.f32.mxu0 0.0
    %778 = vmatmul.mubr.f32.gmra.mrb[0].mxu0 %v711
    %v779 = vpop.f32.mrb[0].mxu0
    %v780 = vadd.f32 %v58, %v779
    %v781 = vpop.f32.mrb[0].mxu0
    %782 = vdwg.mxu0
    %v783 = vxor.u32 %v780, 2147483648
    %v784 = vmul.f32 %v783, 1.442695
    %v785 = vpow.pop %v784
    %v786 = vadd.f32 %v785, 1.0
    %v787 = vrcp.pop %v786
    %v788 = vmul.f32 1.0, %v787
    %v789 = vtanh.pop %v780
    %v790 = vsel %vm145, %v789, %v788
    %v791 = vmul.f32 %v790, %v590
    %793 = vrot.lane.b32.xlu0 %v790, 64
    %v794 = vpop.permute.xlu0 %793
    %v796 = vmul.f32 %v790, %v794
    %798 = vrot.lane.b32.xlu0 %v796, 32
    %v799 = vpop.permute.xlu0 %798
    %v801 = vadd.f32 %v791, %v799
    %v802 = vtanh.pop %v801
    %804 = vrot.lane.b32.xlu0 %v802, 64
    %v805 = vpop.permute.xlu0 %804
    %v807 = vmul.f32 %v790, %v805
    %809 = vrot.lane.b32.xlu0 %v807, 32
    %v810 = vpop.permute.xlu0 %809
    %813 = vrot.lane.b32.xlu0 %v703, 64
    %v814 = vpop.permute.xlu0 %813
    %v816 = vsel %vm43, %v810, %v814
    %v818 = vsel %vm60, %v816, 0
    %820 = vmatprep.subr.mxu0 0.0
    %821 = vmatpush1.msra.mxu0 %v169
    %822 = vmatprep.subr.mxu0 0.0
    %823 = vmatpush1.msra.mxu0 %v170
    %824 = vmatprep.subr.mxu0 0.0
    %825 = vmatpush1.msra.mxu0 %v171
    %826 = vmatprep.subr.mxu0 0.0
    %827 = vmatpush1.msra.mxu0 %v172
    %828 = vmatprep.subr.mxu0 0.0
    %829 = vmatpush1.msra.mxu0 %v173
    %830 = vmatprep.subr.mxu0 0.0
    %831 = vmatpush1.msra.mxu0 %v174
    %832 = vmatprep.subr.mxu0 0.0
    %833 = vmatpush1.msra.mxu0 %v175
    %834 = vmatprep.subr.mxu0 0.0
    %835 = vmatpush1.msra.mxu0 %v176
    %836 = vmatprep.subr.mxu0 0.0
    %837 = vmatpush1.msra.mxu0 0.0
    %838 = vmatprep.subr.mxu0 0.0
    %839 = vmatpush1.msra.mxu0 0.0
    %840 = vmatprep.subr.mxu0 0.0
    %841 = vmatpush1.msra.mxu0 0.0
    %842 = vmatprep.subr.mxu0 0.0
    %843 = vmatpush1.msra.mxu0 0.0
    %844 = vmatprep.subr.mxu0 0.0
    %845 = vmatpush1.msra.mxu0 0.0
    %846 = vmatprep.subr.mxu0 0.0
    %847 = vmatpush1.msra.mxu0 0.0
    %848 = vmatprep.subr.mxu0 0.0
    %849 = vmatpush1.msra.mxu0 0.0
    %850 = vmatprep.subr.mxu0 0.0
    %851 = vmatpush1.msra.mxu0 0.0
    %852 = vmatprep.subr.mxu0 0.0
    %853 = vmatpush1.msra.mxu0 0.0
    %854 = vmatprep.subr.mxu0 0.0
    %855 = vmatpush1.msra.mxu0 0.0
    %856 = vmatprep.subr.mxu0 0.0
    %857 = vmatpush1.msra.mxu0 0.0
    %858 = vmatprep.subr.mxu0 0.0
    %859 = vmatpush1.msra.mxu0 0.0
    %860 = vmatprep.subr.mxu0 0.0
    %861 = vmatpush1.msra.mxu0 0.0
    %862 = vmatprep.subr.mxu0 0.0
    %863 = vmatpush1.msra.mxu0 0.0
    %864 = vmatprep.subr.mxu0 0.0
    %865 = vmatpush1.msra.mxu0 0.0
    %866 = vmatprep.subr.mxu0 0.0
    %867 = vmatpush1.msra.mxu0 0.0
    %868 = vmatprep.subr.mxu0 0.0
    %869 = vmatpush1.msra.mxu0 0.0
    %870 = vmatprep.subr.mxu0 0.0
    %871 = vmatpush1.msra.mxu0 0.0
    %872 = vmatprep.subr.mxu0 0.0
    %873 = vmatpush1.msra.mxu0 0.0
    %874 = vmatprep.subr.mxu0 0.0
    %875 = vmatpush1.msra.mxu0 0.0
    %876 = vmatprep.subr.mxu0 0.0
    %877 = vmatpush1.msra.mxu0 0.0
    %878 = vmatprep.subr.mxu0 0.0
    %879 = vmatpush1.msra.mxu0 0.0
    %880 = vmatprep.subr.mxu0 0.0
    %881 = vmatpush1.msra.mxu0 0.0
    %882 = vmatprep.subr.mxu0 0.0
    %883 = vmatpush1.msra.mxu0 0.0
    %884 = vmatprep.mubr.f32.mxu0 0.0
    %885 = vmatmul.mubr.f32.gmra.mrb[0].mxu0 %v818
    %v886 = vpop.f32.mrb[0].mxu0
    %v887 = vadd.f32 %v182, %v886
    %v888 = vpop.f32.mrb[0].mxu0
    %889 = vdwg.mxu0
    %v890 = vxor.u32 %v887, 2147483648
    %v891 = vmul.f32 %v890, 1.442695
    %v892 = vpow.pop %v891
    %v893 = vadd.f32 %v892, 1.0
    %v894 = vrcp.pop %v893
    %v895 = vmul.f32 1.0, %v894
    %v896 = vtanh.pop %v887
    %v897 = vsel %vm145, %v896, %v895
    %v898 = vmul.f32 %v897, %v697
    %900 = vrot.lane.b32.xlu0 %v897, 64
    %v901 = vpop.permute.xlu0 %900
    %v903 = vmul.f32 %v897, %v901
    %905 = vrot.lane.b32.xlu0 %v903, 32
    %v906 = vpop.permute.xlu0 %905
    %v908 = vadd.f32 %v898, %v906
    %v909 = vtanh.pop %v908
    %911 = vrot.lane.b32.xlu0 %v909, 64
    %v912 = vpop.permute.xlu0 %911
    %v914 = vmul.f32 %v897, %v912
    %s915 = scalar_lea.vmem %s0, 8
    %v916 = vld [vmem:[%s915] sm:$0x3]
    %917 = vrot.lane.b32.xlu0 %v807, 64
    %v918 = vpop.permute.xlu0 %917
    %v920 = vsel %vm43, %v916, %v918
    %v922 = vsel %vm60, %v920, 0
    %924 = vmatprep.subr.mxu0 0.0
    %925 = vmatpush1.msra.mxu0 %v45
    %926 = vmatprep.subr.mxu0 0.0
    %927 = vmatpush1.msra.mxu0 %v46
    %928 = vmatprep.subr.mxu0 0.0
    %929 = vmatpush1.msra.mxu0 %v47
    %930 = vmatprep.subr.mxu0 0.0
    %931 = vmatpush1.msra.mxu0 %v48
    %932 = vmatprep.subr.mxu0 0.0
    %933 = vmatpush1.msra.mxu0 %v49
    %934 = vmatprep.subr.mxu0 0.0
    %935 = vmatpush1.msra.mxu0 %v50
    %936 = vmatprep.subr.mxu0 0.0
    %937 = vmatpush1.msra.mxu0 %v51
    %938 = vmatprep.subr.mxu0 0.0
    %939 = vmatpush1.msra.mxu0 %v52
    %940 = vmatprep.subr.mxu0 0.0
    %941 = vmatpush1.msra.mxu0 0.0
    %942 = vmatprep.subr.mxu0 0.0
    %943 = vmatpush1.msra.mxu0 0.0
    %944 = vmatprep.subr.mxu0 0.0
    %945 = vmatpush1.msra.mxu0 0.0
    %946 = vmatprep.subr.mxu0 0.0
    %947 = vmatpush1.msra.mxu0 0.0
    %948 = vmatprep.subr.mxu0 0.0
    %949 = vmatpush1.msra.mxu0 0.0
    %950 = vmatprep.subr.mxu0 0.0
    %951 = vmatpush1.msra.mxu0 0.0
    %952 = vmatprep.subr.mxu0 0.0
    %953 = vmatpush1.msra.mxu0 0.0
    %954 = vmatprep.subr.mxu0 0.0
    %955 = vmatpush1.msra.mxu0 0.0
    %956 = vmatprep.subr.mxu0 0.0
    %957 = vmatpush1.msra.mxu0 0.0
    %958 = vmatprep.subr.mxu0 0.0
    %959 = vmatpush1.msra.mxu0 0.0
    %960 = vmatprep.subr.mxu0 0.0
    %961 = vmatpush1.msra.mxu0 0.0
    %962 = vmatprep.subr.mxu0 0.0
    %963 = vmatpush1.msra.mxu0 0.0
    %964 = vmatprep.subr.mxu0 0.0
    %965 = vmatpush1.msra.mxu0 0.0
    %966 = vmatprep.subr.mxu0 0.0
    %967 = vmatpush1.msra.mxu0 0.0
    %968 = vmatprep.subr.mxu0 0.0
    %969 = vmatpush1.msra.mxu0 0.0
    %970 = vmatprep.subr.mxu0 0.0
    %971 = vmatpush1.msra.mxu0 0.0
    %972 = vmatprep.subr.mxu0 0.0
    %973 = vmatpush1.msra.mxu0 0.0
    %974 = vmatprep.subr.mxu0 0.0
    %975 = vmatpush1.msra.mxu0 0.0
    %976 = vmatprep.subr.mxu0 0.0
    %977 = vmatpush1.msra.mxu0 0.0
    %978 = vmatprep.subr.mxu0 0.0
    %979 = vmatpush1.msra.mxu0 0.0
    %980 = vmatprep.subr.mxu0 0.0
    %981 = vmatpush1.msra.mxu0 0.0
    %982 = vmatprep.subr.mxu0 0.0
    %983 = vmatpush1.msra.mxu0 0.0
    %984 = vmatprep.subr.mxu0 0.0
    %985 = vmatpush1.msra.mxu0 0.0
    %986 = vmatprep.subr.mxu0 0.0
    %987 = vmatpush1.msra.mxu0 0.0
    %988 = vmatprep.mubr.f32.mxu0 0.0
    %989 = vmatmul.mubr.f32.gmra.mrb[0].mxu0 %v922
    %v990 = vpop.f32.mrb[0].mxu0
    %v991 = vadd.f32 %v58, %v990
    %v992 = vpop.f32.mrb[0].mxu0
    %993 = vdwg.mxu0
    %v994 = vxor.u32 %v991, 2147483648
    %v995 = vmul.f32 %v994, 1.442695
    %v996 = vpow.pop %v995
    %v997 = vadd.f32 %v996, 1.0
    %v998 = vrcp.pop %v997
    %v999 = vmul.f32 1.0, %v998
    %v1000 = vtanh.pop %v991
    %v1001 = vsel %vm145, %v1000, %v999
    %v1002 = vmul.f32 %v1001, %v801
    %1004 = vrot.lane.b32.xlu0 %v1001, 64
    %v1005 = vpop.permute.xlu0 %1004
    %v1007 = vmul.f32 %v1001, %v1005
    %1009 = vrot.lane.b32.xlu0 %v1007, 32
    %v1010 = vpop.permute.xlu0 %1009
    %v1012 = vadd.f32 %v1002, %v1010
    %v1013 = vtanh.pop %v1012
    %1015 = vrot.lane.b32.xlu0 %v1013, 64
    %v1016 = vpop.permute.xlu0 %1015
    %v1018 = vmul.f32 %v1001, %v1016
    %1020 = vrot.lane.b32.xlu0 %v1018, 32
    %v1021 = vpop.permute.xlu0 %1020
    %1024 = vrot.lane.b32.xlu0 %v914, 64
    %v1025 = vpop.permute.xlu0 %1024
    %v1027 = vsel %vm43, %v1021, %v1025
    %v1029 = vsel %vm60, %v1027, 0
    %1031 = vmatprep.subr.mxu0 0.0
    %1032 = vmatpush1.msra.mxu0 %v169
    %1033 = vmatprep.subr.mxu0 0.0
    %1034 = vmatpush1.msra.mxu0 %v170
    %1035 = vmatprep.subr.mxu0 0.0
    %1036 = vmatpush1.msra.mxu0 %v171
    %1037 = vmatprep.subr.mxu0 0.0
    %1038 = vmatpush1.msra.mxu0 %v172
    %1039 = vmatprep.subr.mxu0 0.0
    %1040 = vmatpush1.msra.mxu0 %v173
    %1041 = vmatprep.subr.mxu0 0.0
    %1042 = vmatpush1.msra.mxu0 %v174
    %1043 = vmatprep.subr.mxu0 0.0
    %1044 = vmatpush1.msra.mxu0 %v175
    %1045 = vmatprep.subr.mxu0 0.0
    %1046 = vmatpush1.msra.mxu0 %v176
    %1047 = vmatprep.subr.mxu0 0.0
    %1048 = vmatpush1.msra.mxu0 0.0
    %1049 = vmatprep.subr.mxu0 0.0
    %1050 = vmatpush1.msra.mxu0 0.0
    %1051 = vmatprep.subr.mxu0 0.0
    %1052 = vmatpush1.msra.mxu0 0.0
    %1053 = vmatprep.subr.mxu0 0.0
    %1054 = vmatpush1.msra.mxu0 0.0
    %1055 = vmatprep.subr.mxu0 0.0
    %1056 = vmatpush1.msra.mxu0 0.0
    %1057 = vmatprep.subr.mxu0 0.0
    %1058 = vmatpush1.msra.mxu0 0.0
    %1059 = vmatprep.subr.mxu0 0.0
    %1060 = vmatpush1.msra.mxu0 0.0
    %1061 = vmatprep.subr.mxu0 0.0
    %1062 = vmatpush1.msra.mxu0 0.0
    %1063 = vmatprep.subr.mxu0 0.0
    %1064 = vmatpush1.msra.mxu0 0.0
    %1065 = vmatprep.subr.mxu0 0.0
    %1066 = vmatpush1.msra.mxu0 0.0
    %1067 = vmatprep.subr.mxu0 0.0
    %1068 = vmatpush1.msra.mxu0 0.0
    %1069 = vmatprep.subr.mxu0 0.0
    %1070 = vmatpush1.msra.mxu0 0.0
    %1071 = vmatprep.subr.mxu0 0.0
    %1072 = vmatpush1.msra.mxu0 0.0
    %1073 = vmatprep.subr.mxu0 0.0
    %1074 = vmatpush1.msra.mxu0 0.0
    %1075 = vmatprep.subr.mxu0 0.0
    %1076 = vmatpush1.msra.mxu0 0.0
    %1077 = vmatprep.subr.mxu0 0.0
    %1078 = vmatpush1.msra.mxu0 0.0
    %1079 = vmatprep.subr.mxu0 0.0
    %1080 = vmatpush1.msra.mxu0 0.0
    %1081 = vmatprep.subr.mxu0 0.0
    %1082 = vmatpush1.msra.mxu0 0.0
    %1083 = vmatprep.subr.mxu0 0.0
    %1084 = vmatpush1.msra.mxu0 0.0
    %1085 = vmatprep.subr.mxu0 0.0
    %1086 = vmatpush1.msra.mxu0 0.0
    %1087 = vmatprep.subr.mxu0 0.0
    %1088 = vmatpush1.msra.mxu0 0.0
    %1089 = vmatprep.subr.mxu0 0.0
    %1090 = vmatpush1.msra.mxu0 0.0
    %1091 = vmatprep.subr.mxu0 0.0
    %1092 = vmatpush1.msra.mxu0 0.0
    %1093 = vmatprep.subr.mxu0 0.0
    %1094 = vmatpush1.msra.mxu0 0.0
    %1095 = vmatprep.mubr.f32.mxu0 0.0
    %1096 = vmatmul.mubr.f32.gmra.mrb[0].mxu0 %v1029
    %v1097 = vpop.f32.mrb[0].mxu0
    %v1098 = vadd.f32 %v182, %v1097
    %v1099 = vpop.f32.mrb[0].mxu0
    %1100 = vdwg.mxu0
    %v1101 = vxor.u32 %v1098, 2147483648
    %v1102 = vmul.f32 %v1101, 1.442695
    %v1103 = vpow.pop %v1102
    %v1104 = vadd.f32 %v1103, 1.0
    %v1105 = vrcp.pop %v1104
    %v1106 = vmul.f32 1.0, %v1105
    %v1107 = vtanh.pop %v1098
    %v1108 = vsel %vm145, %v1107, %v1106
    %v1109 = vmul.f32 %v1108, %v908
    %1111 = vrot.lane.b32.xlu0 %v1108, 64
    %v1112 = vpop.permute.xlu0 %1111
    %v1114 = vmul.f32 %v1108, %v1112
    %1116 = vrot.lane.b32.xlu0 %v1114, 32
    %v1117 = vpop.permute.xlu0 %1116
    %v1119 = vadd.f32 %v1109, %v1117
    %v1120 = vtanh.pop %v1119
    %1122 = vrot.lane.b32.xlu0 %v1120, 64
    %v1123 = vpop.permute.xlu0 %1122
    %v1125 = vmul.f32 %v1108, %v1123
    %s1126 = scalar_lea.vmem %s0, 10
    %v1127 = vld [vmem:[%s1126] sm:$0x3]
    %1128 = vrot.lane.b32.xlu0 %v1018, 64
    %v1129 = vpop.permute.xlu0 %1128
    %v1131 = vsel %vm43, %v1127, %v1129
    %v1133 = vsel %vm60, %v1131, 0
    %1135 = vmatprep.subr.mxu0 0.0
    %1136 = vmatpush1.msra.mxu0 %v45
    %1137 = vmatprep.subr.mxu0 0.0
    %1138 = vmatpush1.msra.mxu0 %v46
    %1139 = vmatprep.subr.mxu0 0.0
    %1140 = vmatpush1.msra.mxu0 %v47
    %1141 = vmatprep.subr.mxu0 0.0
    %1142 = vmatpush1.msra.mxu0 %v48
    %1143 = vmatprep.subr.mxu0 0.0
    %1144 = vmatpush1.msra.mxu0 %v49
    %1145 = vmatprep.subr.mxu0 0.0
    %1146 = vmatpush1.msra.mxu0 %v50
    %1147 = vmatprep.subr.mxu0 0.0
    %1148 = vmatpush1.msra.mxu0 %v51
    %1149 = vmatprep.subr.mxu0 0.0
    %1150 = vmatpush1.msra.mxu0 %v52
    %1151 = vmatprep.subr.mxu0 0.0
    %1152 = vmatpush1.msra.mxu0 0.0
    %1153 = vmatprep.subr.mxu0 0.0
    %1154 = vmatpush1.msra.mxu0 0.0
    %1155 = vmatprep.subr.mxu0 0.0
    %1156 = vmatpush1.msra.mxu0 0.0
    %1157 = vmatprep.subr.mxu0 0.0
    %1158 = vmatpush1.msra.mxu0 0.0
    %1159 = vmatprep.subr.mxu0 0.0
    %1160 = vmatpush1.msra.mxu0 0.0
    %1161 = vmatprep.subr.mxu0 0.0
    %1162 = vmatpush1.msra.mxu0 0.0
    %1163 = vmatprep.subr.mxu0 0.0
    %1164 = vmatpush1.msra.mxu0 0.0
    %1165 = vmatprep.subr.mxu0 0.0
    %1166 = vmatpush1.msra.mxu0 0.0
    %1167 = vmatprep.subr.mxu0 0.0
    %1168 = vmatpush1.msra.mxu0 0.0
    %1169 = vmatprep.subr.mxu0 0.0
    %1170 = vmatpush1.msra.mxu0 0.0
    %1171 = vmatprep.subr.mxu0 0.0
    %1172 = vmatpush1.msra.mxu0 0.0
    %1173 = vmatprep.subr.mxu0 0.0
    %1174 = vmatpush1.msra.mxu0 0.0
    %1175 = vmatprep.subr.mxu0 0.0
    %1176 = vmatpush1.msra.mxu0 0.0
    %1177 = vmatprep.subr.mxu0 0.0
    %1178 = vmatpush1.msra.mxu0 0.0
    %1179 = vmatprep.subr.mxu0 0.0
    %1180 = vmatpush1.msra.mxu0 0.0
    %1181 = vmatprep.subr.mxu0 0.0
    %1182 = vmatpush1.msra.mxu0 0.0
    %1183 = vmatprep.subr.mxu0 0.0
    %1184 = vmatpush1.msra.mxu0 0.0
    %1185 = vmatprep.subr.mxu0 0.0
    %1186 = vmatpush1.msra.mxu0 0.0
    %1187 = vmatprep.subr.mxu0 0.0
    %1188 = vmatpush1.msra.mxu0 0.0
    %1189 = vmatprep.subr.mxu0 0.0
    %1190 = vmatpush1.msra.mxu0 0.0
    %1191 = vmatprep.subr.mxu0 0.0
    %1192 = vmatpush1.msra.mxu0 0.0
    %1193 = vmatprep.subr.mxu0 0.0
    %1194 = vmatpush1.msra.mxu0 0.0
    %1195 = vmatprep.subr.mxu0 0.0
    %1196 = vmatpush1.msra.mxu0 0.0
    %1197 = vmatprep.subr.mxu0 0.0
    %1198 = vmatpush1.msra.mxu0 0.0
    %1199 = vmatprep.mubr.f32.mxu0 0.0
    %1200 = vmatmul.mubr.f32.gmra.mrb[0].mxu0 %v1133
    %v1201 = vpop.f32.mrb[0].mxu0
    %v1202 = vadd.f32 %v58, %v1201
    %v1203 = vpop.f32.mrb[0].mxu0
    %1204 = vdwg.mxu0
    %v1205 = vxor.u32 %v1202, 2147483648
    %v1206 = vmul.f32 %v1205, 1.442695
    %v1207 = vpow.pop %v1206
    %v1208 = vadd.f32 %v1207, 1.0
    %v1209 = vrcp.pop %v1208
    %v1210 = vmul.f32 1.0, %v1209
    %v1211 = vtanh.pop %v1202
    %v1212 = vsel %vm145, %v1211, %v1210
    %v1213 = vmul.f32 %v1212, %v1012
    %1215 = vrot.lane.b32.xlu0 %v1212, 64
    %v1216 = vpop.permute.xlu0 %1215
    %v1218 = vmul.f32 %v1212, %v1216
    %1220 = vrot.lane.b32.xlu0 %v1218, 32
    %v1221 = vpop.permute.xlu0 %1220
    %v1223 = vadd.f32 %v1213, %v1221
    %v1224 = vtanh.pop %v1223
    %1226 = vrot.lane.b32.xlu0 %v1224, 64
    %v1227 = vpop.permute.xlu0 %1226
    %v1229 = vmul.f32 %v1212, %v1227
    %1231 = vrot.lane.b32.xlu0 %v1229, 32
    %v1232 = vpop.permute.xlu0 %1231
    %1235 = vrot.lane.b32.xlu0 %v1125, 64
    %v1236 = vpop.permute.xlu0 %1235
    %v1238 = vsel %vm43, %v1232, %v1236
    %v1240 = vsel %vm60, %v1238, 0
    %1242 = vmatprep.subr.mxu0 0.0
    %1243 = vmatpush1.msra.mxu0 %v169
    %1244 = vmatprep.subr.mxu0 0.0
    %1245 = vmatpush1.msra.mxu0 %v170
    %1246 = vmatprep.subr.mxu0 0.0
    %1247 = vmatpush1.msra.mxu0 %v171
    %1248 = vmatprep.subr.mxu0 0.0
    %1249 = vmatpush1.msra.mxu0 %v172
    %1250 = vmatprep.subr.mxu0 0.0
    %1251 = vmatpush1.msra.mxu0 %v173
    %1252 = vmatprep.subr.mxu0 0.0
    %1253 = vmatpush1.msra.mxu0 %v174
    %1254 = vmatprep.subr.mxu0 0.0
    %1255 = vmatpush1.msra.mxu0 %v175
    %1256 = vmatprep.subr.mxu0 0.0
    %1257 = vmatpush1.msra.mxu0 %v176
    %1258 = vmatprep.subr.mxu0 0.0
    %1259 = vmatpush1.msra.mxu0 0.0
    %1260 = vmatprep.subr.mxu0 0.0
    %1261 = vmatpush1.msra.mxu0 0.0
    %1262 = vmatprep.subr.mxu0 0.0
    %1263 = vmatpush1.msra.mxu0 0.0
    %1264 = vmatprep.subr.mxu0 0.0
    %1265 = vmatpush1.msra.mxu0 0.0
    %1266 = vmatprep.subr.mxu0 0.0
    %1267 = vmatpush1.msra.mxu0 0.0
    %1268 = vmatprep.subr.mxu0 0.0
    %1269 = vmatpush1.msra.mxu0 0.0
    %1270 = vmatprep.subr.mxu0 0.0
    %1271 = vmatpush1.msra.mxu0 0.0
    %1272 = vmatprep.subr.mxu0 0.0
    %1273 = vmatpush1.msra.mxu0 0.0
    %1274 = vmatprep.subr.mxu0 0.0
    %1275 = vmatpush1.msra.mxu0 0.0
    %1276 = vmatprep.subr.mxu0 0.0
    %1277 = vmatpush1.msra.mxu0 0.0
    %1278 = vmatprep.subr.mxu0 0.0
    %1279 = vmatpush1.msra.mxu0 0.0
    %1280 = vmatprep.subr.mxu0 0.0
    %1281 = vmatpush1.msra.mxu0 0.0
    %1282 = vmatprep.subr.mxu0 0.0
    %1283 = vmatpush1.msra.mxu0 0.0
    %1284 = vmatprep.subr.mxu0 0.0
    %1285 = vmatpush1.msra.mxu0 0.0
    %1286 = vmatprep.subr.mxu0 0.0
    %1287 = vmatpush1.msra.mxu0 0.0
    %1288 = vmatprep.subr.mxu0 0.0
    %1289 = vmatpush1.msra.mxu0 0.0
    %1290 = vmatprep.subr.mxu0 0.0
    %1291 = vmatpush1.msra.mxu0 0.0
    %1292 = vmatprep.subr.mxu0 0.0
    %1293 = vmatpush1.msra.mxu0 0.0
    %1294 = vmatprep.subr.mxu0 0.0
    %1295 = vmatpush1.msra.mxu0 0.0
    %1296 = vmatprep.subr.mxu0 0.0
    %1297 = vmatpush1.msra.mxu0 0.0
    %1298 = vmatprep.subr.mxu0 0.0
    %1299 = vmatpush1.msra.mxu0 0.0
    %1300 = vmatprep.subr.mxu0 0.0
    %1301 = vmatpush1.msra.mxu0 0.0
    %1302 = vmatprep.subr.mxu0 0.0
    %1303 = vmatpush1.msra.mxu0 0.0
    %1304 = vmatprep.subr.mxu0 0.0
    %1305 = vmatpush1.msra.mxu0 0.0
    %1306 = vmatprep.mubr.f32.mxu0 0.0
    %1307 = vmatmul.mubr.f32.gmra.mrb[0].mxu0 %v1240
    %v1308 = vpop.f32.mrb[0].mxu0
    %v1309 = vadd.f32 %v182, %v1308
    %v1310 = vpop.f32.mrb[0].mxu0
    %1311 = vdwg.mxu0
    %v1312 = vxor.u32 %v1309, 2147483648
    %v1313 = vmul.f32 %v1312, 1.442695
    %v1314 = vpow.pop %v1313
    %v1315 = vadd.f32 %v1314, 1.0
    %v1316 = vrcp.pop %v1315
    %v1317 = vmul.f32 1.0, %v1316
    %v1318 = vtanh.pop %v1309
    %v1319 = vsel %vm145, %v1318, %v1317
    %v1320 = vmul.f32 %v1319, %v1119
    %1322 = vrot.lane.b32.xlu0 %v1319, 64
    %v1323 = vpop.permute.xlu0 %1322
    %v1325 = vmul.f32 %v1319, %v1323
    %1327 = vrot.lane.b32.xlu0 %v1325, 32
    %v1328 = vpop.permute.xlu0 %1327
    %v1330 = vadd.f32 %v1320, %v1328
    %v1331 = vtanh.pop %v1330
    %1333 = vrot.lane.b32.xlu0 %v1331, 64
    %v1334 = vpop.permute.xlu0 %1333
    %v1336 = vmul.f32 %v1319, %v1334
    %s1337 = scalar_lea.vmem %s0, 12
    %v1338 = vld [vmem:[%s1337] sm:$0x3]
    %1339 = vrot.lane.b32.xlu0 %v1229, 64
    %v1340 = vpop.permute.xlu0 %1339
    %v1342 = vsel %vm43, %v1338, %v1340
    %v1344 = vsel %vm60, %v1342, 0
    %1346 = vmatprep.subr.mxu0 0.0
    %1347 = vmatpush1.msra.mxu0 %v45
    %1348 = vmatprep.subr.mxu0 0.0
    %1349 = vmatpush1.msra.mxu0 %v46
    %1350 = vmatprep.subr.mxu0 0.0
    %1351 = vmatpush1.msra.mxu0 %v47
    %1352 = vmatprep.subr.mxu0 0.0
    %1353 = vmatpush1.msra.mxu0 %v48
    %1354 = vmatprep.subr.mxu0 0.0
    %1355 = vmatpush1.msra.mxu0 %v49
    %1356 = vmatprep.subr.mxu0 0.0
    %1357 = vmatpush1.msra.mxu0 %v50
    %1358 = vmatprep.subr.mxu0 0.0
    %1359 = vmatpush1.msra.mxu0 %v51
    %1360 = vmatprep.subr.mxu0 0.0
    %1361 = vmatpush1.msra.mxu0 %v52
    %1362 = vmatprep.subr.mxu0 0.0
    %1363 = vmatpush1.msra.mxu0 0.0
    %1364 = vmatprep.subr.mxu0 0.0
    %1365 = vmatpush1.msra.mxu0 0.0
    %1366 = vmatprep.subr.mxu0 0.0
    %1367 = vmatpush1.msra.mxu0 0.0
    %1368 = vmatprep.subr.mxu0 0.0
    %1369 = vmatpush1.msra.mxu0 0.0
    %1370 = vmatprep.subr.mxu0 0.0
    %1371 = vmatpush1.msra.mxu0 0.0
    %1372 = vmatprep.subr.mxu0 0.0
    %1373 = vmatpush1.msra.mxu0 0.0
    %1374 = vmatprep.subr.mxu0 0.0
    %1375 = vmatpush1.msra.mxu0 0.0
    %1376 = vmatprep.subr.mxu0 0.0
    %1377 = vmatpush1.msra.mxu0 0.0
    %1378 = vmatprep.subr.mxu0 0.0
    %1379 = vmatpush1.msra.mxu0 0.0
    %1380 = vmatprep.subr.mxu0 0.0
    %1381 = vmatpush1.msra.mxu0 0.0
    %1382 = vmatprep.subr.mxu0 0.0
    %1383 = vmatpush1.msra.mxu0 0.0
    %1384 = vmatprep.subr.mxu0 0.0
    %1385 = vmatpush1.msra.mxu0 0.0
    %1386 = vmatprep.subr.mxu0 0.0
    %1387 = vmatpush1.msra.mxu0 0.0
    %1388 = vmatprep.subr.mxu0 0.0
    %1389 = vmatpush1.msra.mxu0 0.0
    %1390 = vmatprep.subr.mxu0 0.0
    %1391 = vmatpush1.msra.mxu0 0.0
    %1392 = vmatprep.subr.mxu0 0.0
    %1393 = vmatpush1.msra.mxu0 0.0
    %1394 = vmatprep.subr.mxu0 0.0
    %1395 = vmatpush1.msra.mxu0 0.0
    %1396 = vmatprep.subr.mxu0 0.0
    %1397 = vmatpush1.msra.mxu0 0.0
    %1398 = vmatprep.subr.mxu0 0.0
    %1399 = vmatpush1.msra.mxu0 0.0
    %1400 = vmatprep.subr.mxu0 0.0
    %1401 = vmatpush1.msra.mxu0 0.0
    %1402 = vmatprep.subr.mxu0 0.0
    %1403 = vmatpush1.msra.mxu0 0.0
    %1404 = vmatprep.subr.mxu0 0.0
    %1405 = vmatpush1.msra.mxu0 0.0
    %1406 = vmatprep.subr.mxu0 0.0
    %1407 = vmatpush1.msra.mxu0 0.0
    %1408 = vmatprep.subr.mxu0 0.0
    %1409 = vmatpush1.msra.mxu0 0.0
    %1410 = vmatprep.mubr.f32.mxu0 0.0
    %1411 = vmatmul.mubr.f32.gmra.mrb[0].mxu0 %v1344
    %v1412 = vpop.f32.mrb[0].mxu0
    %v1413 = vadd.f32 %v58, %v1412
    %v1414 = vpop.f32.mrb[0].mxu0
    %1415 = vdwg.mxu0
    %v1416 = vxor.u32 %v1413, 2147483648
    %v1417 = vmul.f32 %v1416, 1.442695
    %v1418 = vpow.pop %v1417
    %v1419 = vadd.f32 %v1418, 1.0
    %v1420 = vrcp.pop %v1419
    %v1421 = vmul.f32 1.0, %v1420
    %v1422 = vtanh.pop %v1413
    %v1423 = vsel %vm145, %v1422, %v1421
    %v1424 = vmul.f32 %v1423, %v1223
    %1426 = vrot.lane.b32.xlu0 %v1423, 64
    %v1427 = vpop.permute.xlu0 %1426
    %v1429 = vmul.f32 %v1423, %v1427
    %1431 = vrot.lane.b32.xlu0 %v1429, 32
    %v1432 = vpop.permute.xlu0 %1431
    %v1434 = vadd.f32 %v1424, %v1432
    %v1435 = vtanh.pop %v1434
    %1437 = vrot.lane.b32.xlu0 %v1435, 64
    %v1438 = vpop.permute.xlu0 %1437
    %v1440 = vmul.f32 %v1423, %v1438
    %1442 = vrot.lane.b32.xlu0 %v1440, 32
    %v1443 = vpop.permute.xlu0 %1442
    %1446 = vrot.lane.b32.xlu0 %v1336, 64
    %v1447 = vpop.permute.xlu0 %1446
    %v1449 = vsel %vm43, %v1443, %v1447
    %v1451 = vsel %vm60, %v1449, 0
    %1453 = vmatprep.subr.mxu0 0.0
    %1454 = vmatpush1.msra.mxu0 %v169
    %1455 = vmatprep.subr.mxu0 0.0
    %1456 = vmatpush1.msra.mxu0 %v170
    %1457 = vmatprep.subr.mxu0 0.0
    %1458 = vmatpush1.msra.mxu0 %v171
    %1459 = vmatprep.subr.mxu0 0.0
    %1460 = vmatpush1.msra.mxu0 %v172
    %1461 = vmatprep.subr.mxu0 0.0
    %1462 = vmatpush1.msra.mxu0 %v173
    %1463 = vmatprep.subr.mxu0 0.0
    %1464 = vmatpush1.msra.mxu0 %v174
    %1465 = vmatprep.subr.mxu0 0.0
    %1466 = vmatpush1.msra.mxu0 %v175
    %1467 = vmatprep.subr.mxu0 0.0
    %1468 = vmatpush1.msra.mxu0 %v176
    %1469 = vmatprep.subr.mxu0 0.0
    %1470 = vmatpush1.msra.mxu0 0.0
    %1471 = vmatprep.subr.mxu0 0.0
    %1472 = vmatpush1.msra.mxu0 0.0
    %1473 = vmatprep.subr.mxu0 0.0
    %1474 = vmatpush1.msra.mxu0 0.0
    %1475 = vmatprep.subr.mxu0 0.0
    %1476 = vmatpush1.msra.mxu0 0.0
    %1477 = vmatprep.subr.mxu0 0.0
    %1478 = vmatpush1.msra.mxu0 0.0
    %1479 = vmatprep.subr.mxu0 0.0
    %1480 = vmatpush1.msra.mxu0 0.0
    %1481 = vmatprep.subr.mxu0 0.0
    %1482 = vmatpush1.msra.mxu0 0.0
    %1483 = vmatprep.subr.mxu0 0.0
    %1484 = vmatpush1.msra.mxu0 0.0
    %1485 = vmatprep.subr.mxu0 0.0
    %1486 = vmatpush1.msra.mxu0 0.0
    %1487 = vmatprep.subr.mxu0 0.0
    %1488 = vmatpush1.msra.mxu0 0.0
    %1489 = vmatprep.subr.mxu0 0.0
    %1490 = vmatpush1.msra.mxu0 0.0
    %1491 = vmatprep.subr.mxu0 0.0
    %1492 = vmatpush1.msra.mxu0 0.0
    %1493 = vmatprep.subr.mxu0 0.0
    %1494 = vmatpush1.msra.mxu0 0.0
    %1495 = vmatprep.subr.mxu0 0.0
    %1496 = vmatpush1.msra.mxu0 0.0
    %1497 = vmatprep.subr.mxu0 0.0
    %1498 = vmatpush1.msra.mxu0 0.0
    %1499 = vmatprep.subr.mxu0 0.0
    %1500 = vmatpush1.msra.mxu0 0.0
    %1501 = vmatprep.subr.mxu0 0.0
    %1502 = vmatpush1.msra.mxu0 0.0
    %1503 = vmatprep.subr.mxu0 0.0
    %1504 = vmatpush1.msra.mxu0 0.0
    %1505 = vmatprep.subr.mxu0 0.0
    %1506 = vmatpush1.msra.mxu0 0.0
    %1507 = vmatprep.subr.mxu0 0.0
    %1508 = vmatpush1.msra.mxu0 0.0
    %1509 = vmatprep.subr.mxu0 0.0
    %1510 = vmatpush1.msra.mxu0 0.0
    %1511 = vmatprep.subr.mxu0 0.0
    %1512 = vmatpush1.msra.mxu0 0.0
    %1513 = vmatprep.subr.mxu0 0.0
    %1514 = vmatpush1.msra.mxu0 0.0
    %1515 = vmatprep.subr.mxu0 0.0
    %1516 = vmatpush1.msra.mxu0 0.0
    %1517 = vmatprep.mubr.f32.mxu0 0.0
    %1518 = vmatmul.mubr.f32.gmra.mrb[0].mxu0 %v1451
    %v1519 = vpop.f32.mrb[0].mxu0
    %v1520 = vadd.f32 %v182, %v1519
    %v1521 = vpop.f32.mrb[0].mxu0
    %1522 = vdwg.mxu0
    %v1523 = vxor.u32 %v1520, 2147483648
    %v1524 = vmul.f32 %v1523, 1.442695
    %v1525 = vpow.pop %v1524
    %v1526 = vadd.f32 %v1525, 1.0
    %v1527 = vrcp.pop %v1526
    %v1528 = vmul.f32 1.0, %v1527
    %v1529 = vtanh.pop %v1520
    %v1530 = vsel %vm145, %v1529, %v1528
    %v1531 = vmul.f32 %v1530, %v1330
    %1533 = vrot.lane.b32.xlu0 %v1530, 64
    %v1534 = vpop.permute.xlu0 %1533
    %v1536 = vmul.f32 %v1530, %v1534
    %1538 = vrot.lane.b32.xlu0 %v1536, 32
    %v1539 = vpop.permute.xlu0 %1538
    %v1541 = vadd.f32 %v1531, %v1539
    %v1542 = vtanh.pop %v1541
    %1544 = vrot.lane.b32.xlu0 %v1542, 64
    %v1545 = vpop.permute.xlu0 %1544
    %v1547 = vmul.f32 %v1530, %v1545
    %s1548 = scalar_lea.vmem %s0, 14
    %v1549 = vld [vmem:[%s1548] sm:$0x3]
    %1550 = vrot.lane.b32.xlu0 %v1440, 64
    %v1551 = vpop.permute.xlu0 %1550
    %v1553 = vsel %vm43, %v1549, %v1551
    %v1555 = vsel %vm60, %v1553, 0
    %1557 = vmatprep.subr.mxu0 0.0
    %1558 = vmatpush1.msra.mxu0 %v45
    %1559 = vmatprep.subr.mxu0 0.0
    %1560 = vmatpush1.msra.mxu0 %v46
    %1561 = vmatprep.subr.mxu0 0.0
    %1562 = vmatpush1.msra.mxu0 %v47
    %1563 = vmatprep.subr.mxu0 0.0
    %1564 = vmatpush1.msra.mxu0 %v48
    %1565 = vmatprep.subr.mxu0 0.0
    %1566 = vmatpush1.msra.mxu0 %v49
    %1567 = vmatprep.subr.mxu0 0.0
    %1568 = vmatpush1.msra.mxu0 %v50
    %1569 = vmatprep.subr.mxu0 0.0
    %1570 = vmatpush1.msra.mxu0 %v51
    %1571 = vmatprep.subr.mxu0 0.0
    %1572 = vmatpush1.msra.mxu0 %v52
    %1573 = vmatprep.subr.mxu0 0.0
    %1574 = vmatpush1.msra.mxu0 0.0
    %1575 = vmatprep.subr.mxu0 0.0
    %1576 = vmatpush1.msra.mxu0 0.0
    %1577 = vmatprep.subr.mxu0 0.0
    %1578 = vmatpush1.msra.mxu0 0.0
    %1579 = vmatprep.subr.mxu0 0.0
    %1580 = vmatpush1.msra.mxu0 0.0
    %1581 = vmatprep.subr.mxu0 0.0
    %1582 = vmatpush1.msra.mxu0 0.0
    %1583 = vmatprep.subr.mxu0 0.0
    %1584 = vmatpush1.msra.mxu0 0.0
    %1585 = vmatprep.subr.mxu0 0.0
    %1586 = vmatpush1.msra.mxu0 0.0
    %1587 = vmatprep.subr.mxu0 0.0
    %1588 = vmatpush1.msra.mxu0 0.0
    %1589 = vmatprep.subr.mxu0 0.0
    %1590 = vmatpush1.msra.mxu0 0.0
    %1591 = vmatprep.subr.mxu0 0.0
    %1592 = vmatpush1.msra.mxu0 0.0
    %1593 = vmatprep.subr.mxu0 0.0
    %1594 = vmatpush1.msra.mxu0 0.0
    %1595 = vmatprep.subr.mxu0 0.0
    %1596 = vmatpush1.msra.mxu0 0.0
    %1597 = vmatprep.subr.mxu0 0.0
    %1598 = vmatpush1.msra.mxu0 0.0
    %1599 = vmatprep.subr.mxu0 0.0
    %1600 = vmatpush1.msra.mxu0 0.0
    %1601 = vmatprep.subr.mxu0 0.0
    %1602 = vmatpush1.msra.mxu0 0.0
    %1603 = vmatprep.subr.mxu0 0.0
    %1604 = vmatpush1.msra.mxu0 0.0
    %1605 = vmatprep.subr.mxu0 0.0
    %1606 = vmatpush1.msra.mxu0 0.0
    %1607 = vmatprep.subr.mxu0 0.0
    %1608 = vmatpush1.msra.mxu0 0.0
    %1609 = vmatprep.subr.mxu0 0.0
    %1610 = vmatpush1.msra.mxu0 0.0
    %1611 = vmatprep.subr.mxu0 0.0
    %1612 = vmatpush1.msra.mxu0 0.0
    %1613 = vmatprep.subr.mxu0 0.0
    %1614 = vmatpush1.msra.mxu0 0.0
    %1615 = vmatprep.subr.mxu0 0.0
    %1616 = vmatpush1.msra.mxu0 0.0
    %1617 = vmatprep.subr.mxu0 0.0
    %1618 = vmatpush1.msra.mxu0 0.0
    %1619 = vmatprep.subr.mxu0 0.0
    %1620 = vmatpush1.msra.mxu0 0.0
    %1621 = vmatprep.mubr.f32.mxu0 0.0
    %1622 = vmatmul.mubr.f32.gmra.mrb[0].mxu0 %v1555
    %v1623 = vpop.f32.mrb[0].mxu0
    %v1624 = vadd.f32 %v58, %v1623
    %v1625 = vpop.f32.mrb[0].mxu0
    %1626 = vdwg.mxu0
    %v1627 = vxor.u32 %v1624, 2147483648
    %v1628 = vmul.f32 %v1627, 1.442695
    %v1629 = vpow.pop %v1628
    %v1630 = vadd.f32 %v1629, 1.0
    %v1631 = vrcp.pop %v1630
    %v1632 = vmul.f32 1.0, %v1631
    %v1633 = vtanh.pop %v1624
    %v1634 = vsel %vm145, %v1633, %v1632
    %v1635 = vmul.f32 %v1634, %v1434
    %1637 = vrot.lane.b32.xlu0 %v1634, 64
    %v1638 = vpop.permute.xlu0 %1637
    %v1640 = vmul.f32 %v1634, %v1638
    %1642 = vrot.lane.b32.xlu0 %v1640, 32
    %v1643 = vpop.permute.xlu0 %1642
    %v1645 = vadd.f32 %v1635, %v1643
    %v1646 = vtanh.pop %v1645
    %1648 = vrot.lane.b32.xlu0 %v1646, 64
    %v1649 = vpop.permute.xlu0 %1648
    %v1651 = vmul.f32 %v1634, %v1649
    %1653 = vrot.lane.b32.xlu0 %v1651, 32
    %v1654 = vpop.permute.xlu0 %1653
    %1657 = vrot.lane.b32.xlu0 %v1547, 64
    %v1658 = vpop.permute.xlu0 %1657
    %v1660 = vsel %vm43, %v1654, %v1658
    %v1662 = vsel %vm60, %v1660, 0
    %1664 = vmatprep.subr.mxu0 0.0
    %1665 = vmatpush1.msra.mxu0 %v169
    %1666 = vmatprep.subr.mxu0 0.0
    %1667 = vmatpush1.msra.mxu0 %v170
    %1668 = vmatprep.subr.mxu0 0.0
    %1669 = vmatpush1.msra.mxu0 %v171
    %1670 = vmatprep.subr.mxu0 0.0
    %1671 = vmatpush1.msra.mxu0 %v172
    %1672 = vmatprep.subr.mxu0 0.0
    %1673 = vmatpush1.msra.mxu0 %v173
    %1674 = vmatprep.subr.mxu0 0.0
    %1675 = vmatpush1.msra.mxu0 %v174
    %1676 = vmatprep.subr.mxu0 0.0
    %1677 = vmatpush1.msra.mxu0 %v175
    %1678 = vmatprep.subr.mxu0 0.0
    %1679 = vmatpush1.msra.mxu0 %v176
    %1680 = vmatprep.subr.mxu0 0.0
    %1681 = vmatpush1.msra.mxu0 0.0
    %1682 = vmatprep.subr.mxu0 0.0
    %1683 = vmatpush1.msra.mxu0 0.0
    %1684 = vmatprep.subr.mxu0 0.0
    %1685 = vmatpush1.msra.mxu0 0.0
    %1686 = vmatprep.subr.mxu0 0.0
    %1687 = vmatpush1.msra.mxu0 0.0
    %1688 = vmatprep.subr.mxu0 0.0
    %1689 = vmatpush1.msra.mxu0 0.0
    %1690 = vmatprep.subr.mxu0 0.0
    %1691 = vmatpush1.msra.mxu0 0.0
    %1692 = vmatprep.subr.mxu0 0.0
    %1693 = vmatpush1.msra.mxu0 0.0
    %1694 = vmatprep.subr.mxu0 0.0
    %1695 = vmatpush1.msra.mxu0 0.0
    %1696 = vmatprep.subr.mxu0 0.0
    %1697 = vmatpush1.msra.mxu0 0.0
    %1698 = vmatprep.subr.mxu0 0.0
    %1699 = vmatpush1.msra.mxu0 0.0
    %1700 = vmatprep.subr.mxu0 0.0
    %1701 = vmatpush1.msra.mxu0 0.0
    %1702 = vmatprep.subr.mxu0 0.0
    %1703 = vmatpush1.msra.mxu0 0.0
    %1704 = vmatprep.subr.mxu0 0.0
    %1705 = vmatpush1.msra.mxu0 0.0
    %1706 = vmatprep.subr.mxu0 0.0
    %1707 = vmatpush1.msra.mxu0 0.0
    %1708 = vmatprep.subr.mxu0 0.0
    %1709 = vmatpush1.msra.mxu0 0.0
    %1710 = vmatprep.subr.mxu0 0.0
    %1711 = vmatpush1.msra.mxu0 0.0
    %1712 = vmatprep.subr.mxu0 0.0
    %1713 = vmatpush1.msra.mxu0 0.0
    %1714 = vmatprep.subr.mxu0 0.0
    %1715 = vmatpush1.msra.mxu0 0.0
    %1716 = vmatprep.subr.mxu0 0.0
    %1717 = vmatpush1.msra.mxu0 0.0
    %1718 = vmatprep.subr.mxu0 0.0
    %1719 = vmatpush1.msra.mxu0 0.0
    %1720 = vmatprep.subr.mxu0 0.0
    %1721 = vmatpush1.msra.mxu0 0.0
    %1722 = vmatprep.subr.mxu0 0.0
    %1723 = vmatpush1.msra.mxu0 0.0
    %1724 = vmatprep.subr.mxu0 0.0
    %1725 = vmatpush1.msra.mxu0 0.0
    %1726 = vmatprep.subr.mxu0 0.0
    %1727 = vmatpush1.msra.mxu0 0.0
    %1728 = vmatprep.mubr.f32.mxu0 0.0
    %1729 = vmatmul.mubr.f32.gmra.mrb[0].mxu0 %v1662
    %v1730 = vpop.f32.mrb[0].mxu0
    %v1731 = vadd.f32 %v182, %v1730
    %v1732 = vpop.f32.mrb[0].mxu0
    %1733 = vdwg.mxu0
    %v1734 = vxor.u32 %v1731, 2147483648
    %v1735 = vmul.f32 %v1734, 1.442695
    %v1736 = vpow.pop %v1735
    %v1737 = vadd.f32 %v1736, 1.0
    %v1738 = vrcp.pop %v1737
    %v1739 = vmul.f32 1.0, %v1738
    %v1740 = vtanh.pop %v1731
    %v1741 = vsel %vm145, %v1740, %v1739
    %v1742 = vmul.f32 %v1741, %v1541
    %1744 = vrot.lane.b32.xlu0 %v1741, 64
    %v1745 = vpop.permute.xlu0 %1744
    %v1747 = vmul.f32 %v1741, %v1745
    %1749 = vrot.lane.b32.xlu0 %v1747, 32
    %v1750 = vpop.permute.xlu0 %1749
    %v1752 = vadd.f32 %v1742, %v1750
    %v1753 = vtanh.pop %v1752
    %1755 = vrot.lane.b32.xlu0 %v1753, 64
    %v1756 = vpop.permute.xlu0 %1755
    %v1758 = vmul.f32 %v1741, %v1756
    %v1759 = vld [vmem:[%s5] sm:$0x1]
    %v1761 = vlaneseq
    %v1762 = vshrl.u32 %v1761, 7
    %v1763 = vsub.s32 0, %v1762
    %v1764 = vrot.slane %v1759, %v1763
    %1765 = vrot.lane.b32.xlu0 %v1764, 96
    %v1766 = vpop.permute.xlu0 %1765
    %v1768 = vmul.f32 %v1758, %v1766
    %1770 = vrot.lane.b32.xlu0 %v1768, 32
    %v1771 = vpop.permute.xlu0 %1770
    %vm1773 = vcmask 254976
    %v1774 = vsel %vm1773, %v1771, 0.0
    %1775 = vadd.xlane.f32.xlu0 %v1774
    %v1776 = vpop.xlane.xlu0 %1775
    %v1777 = vld [vmem:[#allocation2] sm:$0x1]
    %v1779 = vlaneseq
    %v1780 = vshrl.u32 %v1779, 7
    %v1781 = vsub.s32 0, %v1780
    %v1782 = vrot.slane %v1777, %v1781
    %v1784 = vadd.f32 %v1776, %v1782
    %vm1785 = vcmask 1024
    %1786 = vst.msk [vmem:[%s7] sm:$0x3] %vm1785, %v1784
    // Predicated region
    $region34: #{lstm_model_forward.1} parent=1 // pred_check
      _
    $region35: #{lstm_model_forward.1} parent=1 // pred_check_branch
      %1788 = sbr.rel (0) target = $region37
    $region36: #{lstm_model_forward.1} parent=1 // pred_region
      _
    $region37: #{lstm_model_forward.1} parent=1 // pred_fallthru
      _
    // Predicated region
    $region38: #{lstm_model_forward.1} parent=1 // pred_check
      _
    $region39: #{lstm_model_forward.1} parent=1 // pred_check_branch
      %1790 = sbr.rel (0) target = $region41
    $region40: #{lstm_model_forward.1} parent=1 // pred_region
      _
    $region41: #{lstm_model_forward.1} parent=1 // pred_fallthru
      _
    %1791 = vsyncpa [#allocation4], 1

</llo_original>
